<compile_context>
chip_gen: v7x
topology: tpu7x:2x2x1
jax: 0.10.0
libtpu: 0.0.40
codegen_flags: <defaults>
</compile_context>

<pallas_src>
import functools
from collections import OrderedDict
from typing import NamedTuple, Tuple

import numpy as np
import jax
import jax.numpy as jnp
from jax.experimental import pallas as pl
from jax.experimental.pallas import tpu as pltpu

_LANE = 128      # lane width  (last dim alignment)
_SUBLANE = 8     # sublane width (second-to-last dim alignment)

# Conservative working-set budget used to size the batch tile.  Fits within
# v7x's 64 MiB physical VMEM with headroom; v5e/v6e have 128 MiB physical.
_VMEM_WORKING_BUDGET = 40 << 20
_MAX_BATCH_TILE = 1024


def _round_up(x: int, m: int) -> int:
    return ((x + m - 1) // m) * m


# ---------------------------------------------------------------------------
# Pallas kernel: fully fused MLP (all Linear + LeakyReLU layers in one body)
# ---------------------------------------------------------------------------
def _fused_decoder_kernel(*refs, n_layers: int, negative_slope: float):
    """refs = (x_ref, w_0, b_0, w_1, b_1, ..., w_{L-1}, b_{L-1}, o_ref).

    x_ref : (B_TILE, K0_pad) bf16   (streamed per batch tile)
    w_l   : (K_pad_l, N_pad_l) bf16 (grid-invariant -> resident in VMEM)
    b_l   : (1, N_pad_l) f32        (grid-invariant -> resident in VMEM)
    o_ref : (B_TILE, N_last_pad) f32
    """
    x_ref = refs[0]
    o_ref = refs[-1]

    h = x_ref[...]                                        # bf16 activations
    for l in range(n_layers):
        w = refs[1 + 2 * l][...]                          # bf16 weights
        b = refs[2 + 2 * l][...]                          # f32 bias (1, N_pad)
        lhs = h if h.dtype == jnp.bfloat16 else h.astype(jnp.bfloat16)
        # bf16 MXU operands, f32 accumulation.
        y = jnp.dot(lhs, w, preferred_element_type=jnp.float32)
        y = y + b                                         # f32 epilogue (v5e-safe)
        if l != n_layers - 1:
            y = jnp.where(y >= 0, y, negative_slope * y)  # LeakyReLU in f32
        h = y
    o_ref[...] = h.astype(o_ref.dtype)


# ---------------------------------------------------------------------------
# Parameter preparation (hoisted out of the forward path)
# ---------------------------------------------------------------------------
class PreparedDecoderParams(NamedTuple):
    flat: Tuple        # (w0_p, b0_p, w1_p, b1_p, ...), padded + cast once
    layer_dims: Tuple  # ((K, N, K_pad, N_pad), ...) per layer


def prepare_decoder_params(params) -> PreparedDecoderParams:
    """Pad every weight/bias to 128-lane multiples and cast weights to bf16.

    Do this ONCE (at init / load time), not per forward call.
    """
    flat = []
    dims = []
    for (w, b) in params.values():
        K, N = w.shape
        K_p, N_p = _round_up(K, _LANE), _round_up(N, _LANE)
        if (K_p, N_p) == (K, N):
            w_p = w.astype(jnp.bfloat16)
        else:
            w_p = jnp.zeros((K_p, N_p), jnp.bfloat16).at[:K, :N].set(
                w.astype(jnp.bfloat16))
        if N_p == N:
            b_p = b.astype(jnp.float32).reshape(1, N_p)
        else:
            b_p = jnp.zeros((1, N_p), jnp.float32).at[0, :N].set(
                b.astype(jnp.float32))
        flat += [w_p, b_p]
        dims.append((K, N, K_p, N_p))
    return PreparedDecoderParams(tuple(flat), tuple(dims))


# ---------------------------------------------------------------------------
# Wrapper: pad x, build BlockSpecs, single pallas_call over the batch grid
# ---------------------------------------------------------------------------
def decoder_forward(params, x, *, negative_slope: float = 0.2, batch_tile=None):
    """Fused decoder forward: one pallas_call for the whole Linear/LeakyReLU stack.

    `params` may be either a raw OrderedDict of (w, b) pairs or a
    PreparedDecoderParams (preferred: padding/cast hoisted out of the call).
    """
    if not isinstance(params, PreparedDecoderParams):
        params = prepare_decoder_params(params)
    flat, dims = params.flat, params.layer_dims
    n_layers = len(dims)

    B, K0 = x.shape
    assert K0 == dims[0][0], (K0, dims[0])
    K0_pad = dims[0][2]
    N_out, N_last_pad = dims[-1][1], dims[-1][3]
    max_N_pad = max(d[3] for d in dims)

    # Resident weight/bias bytes (bf16 weights + f32 biases).
    weight_bytes = sum(d[2] * d[3] * 2 + d[3] * 4 for d in dims)

    # Per-batch-row VMEM bytes: double-buffered bf16 x tile + double-buffered
    # f32 out tile + ~3 live f32 activations of the widest layer.
    per_row = 2 * K0_pad * 2 + 2 * N_last_pad * 4 + 3 * max_N_pad * 4

    # --- batch tile: as large as the VMEM budget allows, multiple of 8;
    #     keep >= 2 tiles when possible so v7x's 2 TensorCores both get work.
    if batch_tile is None:
        cap = (_VMEM_WORKING_BUDGET - weight_bytes) // max(per_row, 1)
        cap = max(_SUBLANE, min(_MAX_BATCH_TILE, (cap // _SUBLANE) * _SUBLANE))
        B_up = _round_up(B, _SUBLANE)
        if B_up <= cap:
            if B_up >= 2 * _SUBLANE:
                batch_tile = _round_up(-(-B_up // 2), _SUBLANE)  # two tiles
            else:
                batch_tile = B_up
        else:
            batch_tile = cap
    batch_tile = _round_up(max(int(batch_tile), _SUBLANE), _SUBLANE)
    B_pad = _round_up(B, batch_tile)
    grid = (B_pad // batch_tile,)

    # --- pad/cast the streamed input to bf16 (halves its DMA bytes) ---
    x_bf16 = x.astype(jnp.bfloat16)
    if (B_pad, K0_pad) == (B, K0):
        x_pad = x_bf16
    else:
        x_pad = jnp.zeros((B_pad, K0_pad), jnp.bfloat16).at[:B, :K0].set(x_bf16)

    # --- explicit VMEM limit derived from the footprint (with headroom) ---
    x_tile_bytes = 2 * batch_tile * K0_pad * 2          # double-buffered bf16
    out_tile_bytes = 2 * batch_tile * N_last_pad * 4    # double-buffered f32
    act_bytes = 3 * batch_tile * max_N_pad * 4
    footprint = 2 * weight_bytes + x_tile_bytes + out_tile_bytes + act_bytes
    vmem_limit = int(min(100 << 20, max(32 << 20, footprint + (8 << 20))))
    # NOTE: if resident weights ever outgrew the budget (huge decoders on
    # v7x's 64 MiB VMEM) the right fix is a second grid axis splitting the
    # widest layer's N; for this module's layer sizes they are tiny.

    # --- advisory cost estimate so XLA schedules neighbours around the call ---
    flops = 2 * B_pad * sum(d[2] * d[3] for d in dims) \
            + 2 * B_pad * sum(d[3] for d in dims)
    bytes_accessed = (x_pad.size * 2 + B_pad * N_last_pad * 4 + weight_bytes)
    cost = pl.CostEstimate(flops=int(flops), transcendentals=0,
                           bytes_accessed=int(bytes_accessed))

    kernel = functools.partial(
        _fused_decoder_kernel, n_layers=n_layers, negative_slope=negative_slope)

    def _run(single_buffer_weights: bool):
        def const_spec(shape):
            # Constant index_map -> loaded once, resident across all batch
            # tiles.  Single-buffer them (they never change) to halve their
            # VMEM footprint.
            if single_buffer_weights:
                return pl.BlockSpec(shape, lambda i: (0, 0),
                                    pipeline_mode=pl.Buffered(1))
            return pl.BlockSpec(shape, lambda i: (0, 0))

        in_specs = [pl.BlockSpec((batch_tile, K0_pad), lambda i: (i, 0))]
        for (_, _, K_p, N_p) in dims:
            in_specs.append(const_spec((K_p, N_p)))
            in_specs.append(const_spec((1, N_p)))

        return pl.pallas_call(
            kernel,
            out_shape=jax.ShapeDtypeStruct((B_pad, N_last_pad), jnp.float32),
            grid_spec=pltpu.PrefetchScalarGridSpec(
                num_scalar_prefetch=0,
                grid=grid,
                in_specs=in_specs,
                out_specs=pl.BlockSpec((batch_tile, N_last_pad),
                                       lambda i: (i, 0)),
            ),
            compiler_params=pltpu.CompilerParams(
                # batch axis is independent -> shard across both TCs on v7x
                dimension_semantics=("parallel",),
                vmem_limit_bytes=vmem_limit,
            ),
            cost_estimate=cost,
        )(x_pad, *flat)

    try:
        out_pad = _run(True)
    except Exception:
        # Fallback for JAX versions where pipeline_mode=pl.Buffered(1) is not
        # supported by pallas_call-managed pipelining.
        out_pad = _run(False)

    if (B_pad, N_last_pad) == (B, N_out):
        return out_pad
    return out_pad[:B, :N_out]


# ---------------------------------------------------------------------------
# Decoder: parameter construction (matches the PyTorch module's layer sizing)
# ---------------------------------------------------------------------------
def decoder_layer_sizes(input_size: int, output_size: int, n_hidden_layers: int):
    indices = np.arange(2 + n_hidden_layers)
    data_indices = np.array([indices[0], indices[-1]])
    data = np.array([input_size, output_size])
    return np.interp(indices, data_indices, data).astype(int)


def init_decoder_params(key, input_size, output_size, n_hidden_layers):
    """Deterministic synthetic init (PyTorch-Linear-style uniform bounds)."""
    sizes = decoder_layer_sizes(input_size, output_size, n_hidden_layers)
    params = OrderedDict()
    for i in range(1, len(sizes)):
        fan_in, fan_out = int(sizes[i - 1]), int(sizes[i])
        key, kw, kb = jax.random.split(key, 3)
        bound = 1.0 / np.sqrt(fan_in)
        w = jax.random.uniform(kw, (fan_in, fan_out), jnp.float32, -bound, bound)
        b = jax.random.uniform(kb, (fan_out,), jnp.float32, -bound, bound)
        params[f"linear_{i - 1}"] = (w, b)
    return params, sizes


# ---------------------------------------------------------------------------
# Pure-JAX references for sanity checking
# ---------------------------------------------------------------------------
def decoder_forward_ref(params, x, negative_slope: float = 0.2,
                        matmul_dtype=jnp.float32):
    n_layers = len(params)
    out = x.astype(jnp.float32)
    for n, (w, b) in enumerate(params.values()):
        out = jnp.dot(out.astype(matmul_dtype), w.astype(matmul_dtype),
                      preferred_element_type=jnp.float32) + b
        if n != n_layers - 1:
            out = jnp.where(out >= 0, out, negative_slope * out)
    return out


if __name__ == "__main__":
    # Small shapes consistent with the module: latent -> output MLP.
    input_size = 32       # decoder latent (== encoder output)
    output_size = 128     # decoder output (== encoder input)
    n_hidden_layers = 2   # layer sizes: [32, 64, 96, 128]
    batch = 256           # -> two 128-row tiles (keeps both v7x TCs busy)
    negative_slope = 0.2

    key = jax.random.PRNGKey(0)
    key, kx = jax.random.split(key)
    params, sizes = init_decoder_params(key, input_size, output_size,
                                        n_hidden_layers)

    # Hoist padding + bf16 cast out of the forward path (done once).
    prepared = prepare_decoder_params(params)
    prepared = PreparedDecoderParams(
        tuple(jax.block_until_ready(a) for a in prepared.flat),
        prepared.layer_dims)

    x = jax.random.normal(kx, (batch, input_size), jnp.float32)

    y = decoder_forward(prepared, x, negative_slope=negative_slope)
    y = jax.block_until_ready(y)
    assert y.shape == (batch, output_size), y.shape

    # Exact-semantics check vs a reference that uses the same bf16 MXU operands.
    y_ref_bf16 = decoder_forward_ref(params, x, negative_slope,
                                     matmul_dtype=jnp.bfloat16)
    np.testing.assert_allclose(np.asarray(y), np.asarray(y_ref_bf16),
                               rtol=1e-4, atol=1e-4)

    # Loose check vs the full-f32 PyTorch-equivalent reference (bf16 rounding).
    y_ref_f32 = decoder_forward_ref(params, x, negative_slope,
                                    matmul_dtype=jnp.float32)
    np.testing.assert_allclose(np.asarray(y), np.asarray(y_ref_f32),
                               rtol=5e-2, atol=5e-2)

    print("KERNEL_OK")
</pallas_src>

<mosaic_0001>
module attributes {stable_mosaic.version = 11 : i64} {
  func.func @_fused_decoder_kernel(%arg0: i32, %arg1: memref<128x128xbf16, #tpu.memory_space<vmem>>, %arg2: memref<128x128xbf16, #tpu.memory_space<vmem>>, %arg3: memref<1x128xf32, #tpu.memory_space<vmem>>, %arg4: memref<128x128xbf16, #tpu.memory_space<vmem>>, %arg5: memref<1x128xf32, #tpu.memory_space<vmem>>, %arg6: memref<128x128xbf16, #tpu.memory_space<vmem>>, %arg7: memref<1x128xf32, #tpu.memory_space<vmem>>, %arg8: memref<128x128xf32, #tpu.memory_space<vmem>>) attributes {dimension_semantics = [#tpu.dimension_semantics<parallel>], iteration_bounds = array<i64: 2>, scalar_prefetch = 0 : i64, scratch_operands = 0 : i64, tpu.core_type = #tpu.core_type<tc>, window_params = [{transform_indices = @transform_0, window_bounds = array<i64: 128, 128>}, {pipeline_mode = #tpu.pipeline_mode<synchronous>, transform_indices = @transform_1, window_bounds = array<i64: 128, 128>}, {pipeline_mode = #tpu.pipeline_mode<synchronous>, transform_indices = @transform_2, window_bounds = array<i64: 1, 128>}, {pipeline_mode = #tpu.pipeline_mode<synchronous>, transform_indices = @transform_3, window_bounds = array<i64: 128, 128>}, {pipeline_mode = #tpu.pipeline_mode<synchronous>, transform_indices = @transform_4, window_bounds = array<i64: 1, 128>}, {pipeline_mode = #tpu.pipeline_mode<synchronous>, transform_indices = @transform_5, window_bounds = array<i64: 128, 128>}, {pipeline_mode = #tpu.pipeline_mode<synchronous>, transform_indices = @transform_6, window_bounds = array<i64: 1, 128>}, {transform_indices = @transform_7, window_bounds = array<i64: 128, 128>}]} {
    %c0 = arith.constant 0 : index
    %c0_0 = arith.constant 0 : index
    %0 = vector.load %arg1[%c0, %c0_0] : memref<128x128xbf16, #tpu.memory_space<vmem>>, vector<128x128xbf16>
    %c0_1 = arith.constant 0 : index
    %c0_2 = arith.constant 0 : index
    %1 = vector.load %arg2[%c0_1, %c0_2] : memref<128x128xbf16, #tpu.memory_space<vmem>>, vector<128x128xbf16>
    %c0_3 = arith.constant 0 : index
    %c0_4 = arith.constant 0 : index
    %2 = vector.load %arg3[%c0_3, %c0_4] : memref<1x128xf32, #tpu.memory_space<vmem>>, vector<1x128xf32>
    %cst = arith.constant dense<0.000000e+00> : vector<128x128xf32>
    %3 = tpu.matmul %0, %1, %cst {dimension_numbers = #tpu.dot_dimension_numbers<[1], [0], [0], [1], [0, 0, 1, 1], [], []>} : vector<128x128xbf16>, vector<128x128xbf16>, vector<128x128xf32> -> vector<128x128xf32>
    %4 = vector.broadcast %2 : vector<1x128xf32> to vector<128x128xf32>
    %5 = arith.addf %3, %4 : vector<128x128xf32>
    %cst_5 = arith.constant 0.000000e+00 : f32
    %6 = vector.broadcast %cst_5 : f32 to vector<128x128xf32>
    %7 = arith.cmpf oge, %5, %6 : vector<128x128xf32>
    %cst_6 = arith.constant 2.000000e-01 : f32
    %8 = vector.broadcast %cst_6 : f32 to vector<128x128xf32>
    %9 = arith.mulf %8, %5 : vector<128x128xf32>
    %10 = arith.select %7, %5, %9 : vector<128x128xi1>, vector<128x128xf32>
    %c0_7 = arith.constant 0 : index
    %c0_8 = arith.constant 0 : index
    %11 = vector.load %arg4[%c0_7, %c0_8] : memref<128x128xbf16, #tpu.memory_space<vmem>>, vector<128x128xbf16>
    %c0_9 = arith.constant 0 : index
    %c0_10 = arith.constant 0 : index
    %12 = vector.load %arg5[%c0_9, %c0_10] : memref<1x128xf32, #tpu.memory_space<vmem>>, vector<1x128xf32>
    %13 = arith.truncf %10 : vector<128x128xf32> to vector<128x128xbf16>
    %cst_11 = arith.constant dense<0.000000e+00> : vector<128x128xf32>
    %14 = tpu.matmul %13, %11, %cst_11 {dimension_numbers = #tpu.dot_dimension_numbers<[1], [0], [0], [1], [0, 0, 1, 1], [], []>} : vector<128x128xbf16>, vector<128x128xbf16>, vector<128x128xf32> -> vector<128x128xf32>
    %15 = vector.broadcast %12 : vector<1x128xf32> to vector<128x128xf32>
    %16 = arith.addf %14, %15 : vector<128x128xf32>
    %cst_12 = arith.constant 0.000000e+00 : f32
    %17 = vector.broadcast %cst_12 : f32 to vector<128x128xf32>
    %18 = arith.cmpf oge, %16, %17 : vector<128x128xf32>
    %cst_13 = arith.constant 2.000000e-01 : f32
    %19 = vector.broadcast %cst_13 : f32 to vector<128x128xf32>
    %20 = arith.mulf %19, %16 : vector<128x128xf32>
    %21 = arith.select %18, %16, %20 : vector<128x128xi1>, vector<128x128xf32>
    %c0_14 = arith.constant 0 : index
    %c0_15 = arith.constant 0 : index
    %22 = vector.load %arg6[%c0_14, %c0_15] : memref<128x128xbf16, #tpu.memory_space<vmem>>, vector<128x128xbf16>
    %c0_16 = arith.constant 0 : index
    %c0_17 = arith.constant 0 : index
    %23 = vector.load %arg7[%c0_16, %c0_17] : memref<1x128xf32, #tpu.memory_space<vmem>>, vector<1x128xf32>
    %24 = arith.truncf %21 : vector<128x128xf32> to vector<128x128xbf16>
    %cst_18 = arith.constant dense<0.000000e+00> : vector<128x128xf32>
    %25 = tpu.matmul %24, %22, %cst_18 {dimension_numbers = #tpu.dot_dimension_numbers<[1], [0], [0], [1], [0, 0, 1, 1], [], []>} : vector<128x128xbf16>, vector<128x128xbf16>, vector<128x128xf32> -> vector<128x128xf32>
    %26 = vector.broadcast %23 : vector<1x128xf32> to vector<128x128xf32>
    %27 = arith.addf %25, %26 : vector<128x128xf32>
    %c0_19 = arith.constant 0 : index
    %c0_20 = arith.constant 0 : index
    %28 = vector.load %arg8[%c0_19, %c0_20] : memref<128x128xf32, #tpu.memory_space<vmem>>, vector<128x128xf32>
    tpu.vector_store %arg8[%c0_19, %c0_20], %27 {strides = array<i32>} : memref<128x128xf32, #tpu.memory_space<vmem>>, vector<128x128xf32>,
    return
  }
  func.func @transform_0(%arg0: i32) -> (i32, i32) {
    %c0_i32 = arith.constant 0 : i32
    %c0_i32_0 = arith.constant 0 : i32
    return %arg0, %c0_i32 : i32, i32
  }
  func.func @transform_1(%arg0: i32) -> (i32, i32) {
    %c0_i32 = arith.constant 0 : i32
    %c0_i32_0 = arith.constant 0 : i32
    %c0_i32_1 = arith.constant 0 : i32
    return %c0_i32, %c0_i32_0 : i32, i32
  }
  func.func @transform_2(%arg0: i32) -> (i32, i32) {
    %c0_i32 = arith.constant 0 : i32
    %c0_i32_0 = arith.constant 0 : i32
    %c0_i32_1 = arith.constant 0 : i32
    return %c0_i32, %c0_i32_0 : i32, i32
  }
  func.func @transform_3(%arg0: i32) -> (i32, i32) {
    %c0_i32 = arith.constant 0 : i32
    %c0_i32_0 = arith.constant 0 : i32
    %c0_i32_1 = arith.constant 0 : i32
    return %c0_i32, %c0_i32_0 : i32, i32
  }
  func.func @transform_4(%arg0: i32) -> (i32, i32) {
    %c0_i32 = arith.constant 0 : i32
    %c0_i32_0 = arith.constant 0 : i32
    %c0_i32_1 = arith.constant 0 : i32
    return %c0_i32, %c0_i32_0 : i32, i32
  }
  func.func @transform_5(%arg0: i32) -> (i32, i32) {
    %c0_i32 = arith.constant 0 : i32
    %c0_i32_0 = arith.constant 0 : i32
    %c0_i32_1 = arith.constant 0 : i32
    return %c0_i32, %c0_i32_0 : i32, i32
  }
  func.func @transform_6(%arg0: i32) -> (i32, i32) {
    %c0_i32 = arith.constant 0 : i32
    %c0_i32_0 = arith.constant 0 : i32
    %c0_i32_1 = arith.constant 0 : i32
    return %c0_i32, %c0_i32_0 : i32, i32
  }
  func.func @transform_7(%arg0: i32) -> (i32, i32) {
    %c0_i32 = arith.constant 0 : i32
    %c0_i32_0 = arith.constant 0 : i32
    return %arg0, %c0_i32 : i32, i32
  }
}

module attributes {stable_mosaic.version = 11 : i64} {
  func.func @_fused_decoder_kernel(%arg0: i32, %arg1: memref<128x128xbf16, #tpu.memory_space<vmem>>, %arg2: memref<128x128xbf16, #tpu.memory_space<vmem>>, %arg3: memref<1x128xf32, #tpu.memory_space<vmem>>, %arg4: memref<128x128xbf16, #tpu.memory_space<vmem>>, %arg5: memref<1x128xf32, #tpu.memory_space<vmem>>, %arg6: memref<128x128xbf16, #tpu.memory_space<vmem>>, %arg7: memref<1x128xf32, #tpu.memory_space<vmem>>, %arg8: memref<128x128xf32, #tpu.memory_space<vmem>>) attributes {dimension_semantics = [#tpu.dimension_semantics<parallel>], iteration_bounds = array<i64: 2>, scalar_prefetch = 0 : i64, scratch_operands = 0 : i64, tpu.core_type = #tpu.core_type<tc>, window_params = [{transform_indices = @transform_0, window_bounds = array<i64: 128, 128>}, {pipeline_mode = #tpu.pipeline_mode<synchronous>, transform_indices = @transform_1, window_bounds = array<i64: 128, 128>}, {pipeline_mode = #tpu.pipeline_mode<synchronous>, transform_indices = @transform_2, window_bounds = array<i64: 1, 128>}, {pipeline_mode = #tpu.pipeline_mode<synchronous>, transform_indices = @transform_3, window_bounds = array<i64: 128, 128>}, {pipeline_mode = #tpu.pipeline_mode<synchronous>, transform_indices = @transform_4, window_bounds = array<i64: 1, 128>}, {pipeline_mode = #tpu.pipeline_mode<synchronous>, transform_indices = @transform_5, window_bounds = array<i64: 128, 128>}, {pipeline_mode = #tpu.pipeline_mode<synchronous>, transform_indices = @transform_6, window_bounds = array<i64: 1, 128>}, {transform_indices = @transform_7, window_bounds = array<i64: 128, 128>}]} {
    %c0 = arith.constant 0 : index
    %c0_0 = arith.constant 0 : index
    %0 = vector.load %arg1[%c0, %c0_0] : memref<128x128xbf16, #tpu.memory_space<vmem>>, vector<128x128xbf16>
    %c0_1 = arith.constant 0 : index
    %c0_2 = arith.constant 0 : index
    %1 = vector.load %arg2[%c0_1, %c0_2] : memref<128x128xbf16, #tpu.memory_space<vmem>>, vector<128x128xbf16>
    %c0_3 = arith.constant 0 : index
    %c0_4 = arith.constant 0 : index
    %2 = vector.load %arg3[%c0_3, %c0_4] : memref<1x128xf32, #tpu.memory_space<vmem>>, vector<1x128xf32>
    %cst = arith.constant dense<0.000000e+00> : vector<128x128xf32>
    %3 = tpu.matmul %0, %1, %cst {dimension_numbers = #tpu.dot_dimension_numbers<[1], [0], [0], [1], [0, 0, 1, 1], [], []>} : vector<128x128xbf16>, vector<128x128xbf16>, vector<128x128xf32> -> vector<128x128xf32>
    %4 = vector.broadcast %2 : vector<1x128xf32> to vector<128x128xf32>
    %5 = arith.addf %3, %4 : vector<128x128xf32>
    %cst_5 = arith.constant 0.000000e+00 : f32
    %6 = vector.broadcast %cst_5 : f32 to vector<128x128xf32>
    %7 = arith.cmpf oge, %5, %6 : vector<128x128xf32>
    %cst_6 = arith.constant 2.000000e-01 : f32
    %8 = vector.broadcast %cst_6 : f32 to vector<128x128xf32>
    %9 = arith.mulf %8, %5 : vector<128x128xf32>
    %10 = arith.select %7, %5, %9 : vector<128x128xi1>, vector<128x128xf32>
    %c0_7 = arith.constant 0 : index
    %c0_8 = arith.constant 0 : index
    %11 = vector.load %arg4[%c0_7, %c0_8] : memref<128x128xbf16, #tpu.memory_space<vmem>>, vector<128x128xbf16>
    %c0_9 = arith.constant 0 : index
    %c0_10 = arith.constant 0 : index
    %12 = vector.load %arg5[%c0_9, %c0_10] : memref<1x128xf32, #tpu.memory_space<vmem>>, vector<1x128xf32>
    %13 = arith.truncf %10 : vector<128x128xf32> to vector<128x128xbf16>
    %cst_11 = arith.constant dense<0.000000e+00> : vector<128x128xf32>
    %14 = tpu.matmul %13, %11, %cst_11 {dimension_numbers = #tpu.dot_dimension_numbers<[1], [0], [0], [1], [0, 0, 1, 1], [], []>} : vector<128x128xbf16>, vector<128x128xbf16>, vector<128x128xf32> -> vector<128x128xf32>
    %15 = vector.broadcast %12 : vector<1x128xf32> to vector<128x128xf32>
    %16 = arith.addf %14, %15 : vector<128x128xf32>
    %cst_12 = arith.constant 0.000000e+00 : f32
    %17 = vector.broadcast %cst_12 : f32 to vector<128x128xf32>
    %18 = arith.cmpf oge, %16, %17 : vector<128x128xf32>
    %cst_13 = arith.constant 2.000000e-01 : f32
    %19 = vector.broadcast %cst_13 : f32 to vector<128x128xf32>
    %20 = arith.mulf %19, %16 : vector<128x128xf32>
    %21 = arith.select %18, %16, %20 : vector<128x128xi1>, vector<128x128xf32>
    %c0_14 = arith.constant 0 : index
    %c0_15 = arith.constant 0 : index
    %22 = vector.load %arg6[%c0_14, %c0_15] : memref<128x128xbf16, #tpu.memory_space<vmem>>, vector<128x128xbf16>
    %c0_16 = arith.constant 0 : index
    %c0_17 = arith.constant 0 : index
    %23 = vector.load %arg7[%c0_16, %c0_17] : memref<1x128xf32, #tpu.memory_space<vmem>>, vector<1x128xf32>
    %24 = arith.truncf %21 : vector<128x128xf32> to vector<128x128xbf16>
    %cst_18 = arith.constant dense<0.000000e+00> : vector<128x128xf32>
    %25 = tpu.matmul %24, %22, %cst_18 {dimension_numbers = #tpu.dot_dimension_numbers<[1], [0], [0], [1], [0, 0, 1, 1], [], []>} : vector<128x128xbf16>, vector<128x128xbf16>, vector<128x128xf32> -> vector<128x128xf32>
    %26 = vector.broadcast %23 : vector<1x128xf32> to vector<128x128xf32>
    %27 = arith.addf %25, %26 : vector<128x128xf32>
    %c0_19 = arith.constant 0 : index
    %c0_20 = arith.constant 0 : index
    %28 = vector.load %arg8[%c0_19, %c0_20] : memref<128x128xf32, #tpu.memory_space<vmem>>, vector<128x128xf32>
    tpu.vector_store %arg8[%c0_19, %c0_20], %27 {strides = array<i32>} : memref<128x128xf32, #tpu.memory_space<vmem>>, vector<128x128xf32>,
    return
  }
  func.func @transform_0(%arg0: i32) -> (i32, i32) {
    %c0_i32 = arith.constant 0 : i32
    %c0_i32_0 = arith.constant 0 : i32
    return %arg0, %c0_i32 : i32, i32
  }
  func.func @transform_1(%arg0: i32) -> (i32, i32) {
    %c0_i32 = arith.constant 0 : i32
    %c0_i32_0 = arith.constant 0 : i32
    %c0_i32_1 = arith.constant 0 : i32
    return %c0_i32, %c0_i32_0 : i32, i32
  }
  func.func @transform_2(%arg0: i32) -> (i32, i32) {
    %c0_i32 = arith.constant 0 : i32
    %c0_i32_0 = arith.constant 0 : i32
    %c0_i32_1 = arith.constant 0 : i32
    return %c0_i32, %c0_i32_0 : i32, i32
  }
  func.func @transform_3(%arg0: i32) -> (i32, i32) {
    %c0_i32 = arith.constant 0 : i32
    %c0_i32_0 = arith.constant 0 : i32
    %c0_i32_1 = arith.constant 0 : i32
    return %c0_i32, %c0_i32_0 : i32, i32
  }
  func.func @transform_4(%arg0: i32) -> (i32, i32) {
    %c0_i32 = arith.constant 0 : i32
    %c0_i32_0 = arith.constant 0 : i32
    %c0_i32_1 = arith.constant 0 : i32
    return %c0_i32, %c0_i32_0 : i32, i32
  }
  func.func @transform_5(%arg0: i32) -> (i32, i32) {
    %c0_i32 = arith.constant 0 : i32
    %c0_i32_0 = arith.constant 0 : i32
    %c0_i32_1 = arith.constant 0 : i32
    return %c0_i32, %c0_i32_0 : i32, i32
  }
  func.func @transform_6(%arg0: i32) -> (i32, i32) {
    %c0_i32 = arith.constant 0 : i32
    %c0_i32_0 = arith.constant 0 : i32
    %c0_i32_1 = arith.constant 0 : i32
    return %c0_i32, %c0_i32_0 : i32, i32
  }
  func.func @transform_7(%arg0: i32) -> (i32, i32) {
    %c0_i32 = arith.constant 0 : i32
    %c0_i32_0 = arith.constant 0 : i32
    return %arg0, %c0_i32 : i32, i32
  }
}

</mosaic_0001>

<llo_original>
// kernel: tpu_custom_call.1
$region0: #{tpu_custom_call.1}
  #allocation0 [shape = 'u32[]', space=smem, size = 0x4, offset = 0x4, fixed_abs, tag = 'smem constant byte address 0x4 - core index']
  #allocation1 [shape = 'u32[144,128]{1,0:T(1,128)}', space=vmem, size = 0x12000, scoped, tag = 'internal scratch']
  %s0 = inlined_call_operand.hbm [shape: bf16[256,128], index: 0, kind: input, shape index: {}]
  %s1 = inlined_call_operand.hbm [shape: bf16[128,128], index: 1, kind: input, shape index: {}]
  %s2 = inlined_call_operand.vmem [shape: f32[1,128], index: 2, kind: input, shape index: {}]
  %s3 = inlined_call_operand.hbm [shape: bf16[128,128], index: 3, kind: input, shape index: {}]
  %s4 = inlined_call_operand.vmem [shape: f32[1,128], index: 4, kind: input, shape index: {}]
  %s5 = inlined_call_operand.hbm [shape: bf16[128,128], index: 5, kind: input, shape index: {}]
  %s6 = inlined_call_operand.vmem [shape: f32[1,128], index: 6, kind: input, shape index: {}]
  %s7 = inlined_call_operand.hbm [shape: f32[256,128], index: 7, kind: output, shape index: {}]
  %s8 = sld [smem:[#allocation0]]
  $region77: #{tpu_custom_call.1} parent=0
    _
  %s10 = ssub.s32 1, %s8
  %s11 = scalar_select 0, %s10, %s8
  $region1: #{tpu_custom_call.1} parent=0
    #allocation2 [shape = 'u8[65536]{0}', space=vmem, size = 0x10000, scoped, tag = 'input window, operand 0']
    #allocation3 [shape = 's32[2]{0}', space=sflag, size = 0x8, scoped, tag = 'scoped memory for tpu_custom_call.1']
    #allocation4 [shape = 's32[2]{0}', space=sflag, size = 0x8, scoped, tag = 'scoped memory for tpu_custom_call.1']
    #allocation5 [shape = 'u8[32768]{0}', space=vmem, size = 0x8000, scoped, tag = 'input window, operand 1, single buffered']
    #allocation6 [shape = 's32[1]{0}', space=sflag, size = 0x4, scoped, tag = 'scoped memory for tpu_custom_call.1']
    #allocation7 [shape = 'u8[32768]{0}', space=vmem, size = 0x8000, scoped, tag = 'input window, operand 3, single buffered']
    #allocation8 [shape = 'u8[32768]{0}', space=vmem, size = 0x8000, scoped, tag = 'input window, operand 5, single buffered']
    #allocation9 [shape = 's32[1]{0}', space=sflag, size = 0x4, scoped, tag = 'scoped memory for tpu_custom_call.1']
    #allocation10 [shape = 'u8[131072]{0}', space=vmem, size = 0x20000, scoped, tag = 'output window, operand 0']
    %12 = vsyncpa [#allocation3], 0
    %s13 = scalar_lea.sflag [#allocation3], 1
    %14 = vsyncpa %s13, 0
    %15 = vsyncpa [#allocation6], 0
    %16 = vsyncpa [#allocation9], 0
    %17 = vsyncpa [#allocation4], 0
    %s18 = scalar_lea.sflag [#allocation4], 1
    %19 = vsyncpa %s18, 0
    loop: start=0, step=1, limit=4
    $region2: #{tpu_custom_call.1} parent=1 // loop_pre_header
      _
    $region3: #{tpu_custom_call.1} parent=1 // loop_header
      %s21 = sphi 0, %s25
      %p22 = scmp.ge.s32.totalorder %s21, 4
      %s31 = sphi 0, %s33
      %s34 = sphi 0, %s31
      %s35 = sphi 0, %s34
      %s51 = sphi 0, %s35
      %s55 = sphi 0, %s55
      %s57 = sphi 0, %s55
      %s58 = sphi 0, %s57
      %s72 = sphi 0, %s58
      %s76 = sphi 0, %s76
      %s78 = sphi 0, %s76
      %s79 = sphi 0, %s78
      %s93 = sphi 0, %s79
      %s97 = sphi 0, %s97
      %s99 = sphi 0, %s97
      %s100 = sphi 0, %s99
      %s114 = sphi 0, %s100
      %s118 = sphi 0, %s118
      %s120 = sphi 0, %s118
      %s121 = sphi 0, %s120
      %s135 = sphi 0, %s121
      %s139 = sphi 0, %s139
      %s141 = sphi 0, %s139
      %s142 = sphi 0, %s141
      %s156 = sphi 0, %s142
      %s160 = sphi 0, %s160
      %s162 = sphi 0, %s160
      %s163 = sphi 0, %s162
      %s177 = sphi 0, %s163
      %s183 = sphi 0, %s185
      %s186 = sphi 0, %s183
      %s187 = sphi 0, %s186
      %s203 = sphi 0, %s187
    $region4: #{tpu_custom_call.1} parent=1 // loop_header_branch
      %24 = sbr.rel (%p22) target = $region8
    $region5: #{tpu_custom_call.1} parent=1 // loop_body
      %s26 = ssub.s32 %s21, 1
      %s27 = ssub.s32 %s21, 2
      %s28 = sadd.s32 %s21, 1
      %s29 = ssub.s32 %s21, %s28
      %p30 = scmp.eq.s32.totalorder %s29, 0
      %s32 = sadd.s32 %s31, 1
      %s33 = scalar_select %p30, %s31, %s32
      %p36 = pneg %p30
      %p37 = scmp.eq.s32.totalorder %s21, 1
      %p38 = por %p36, %p37
      %p39 = scmp.ne.s32.totalorder %s31, %s34
      %p40 = scmp.eq.s32.totalorder %s21, 0
      %p41 = por %p39, %p40
      %p42 = scmp.ne.s32.totalorder %s31, %s34
      %p43 = scmp.eq.s32.totalorder %s26, 1
      %p44 = por %p42, %p43
      %p45 = scmp.ne.s32.totalorder %s34, %s35
      %p46 = scmp.eq.s32.totalorder %s26, 0
      %p47 = por %p45, %p46
      %p48 = scmp.ne.s32.totalorder %s34, %s35
      %p49 = scmp.eq.s32.totalorder %s27, 1
      %p50 = por %p48, %p49
      %p52 = scmp.ne.s32.totalorder %s35, %s51
      %p53 = scmp.eq.s32.totalorder %s27, 0
      %p54 = por %p52, %p53
      %s56 = sadd.s32 %s55, 1
      %p59 = scmp.eq.s32.totalorder %s21, 1
      %p60 = scmp.ne.s32.totalorder %s55, %s57
      %p61 = scmp.eq.s32.totalorder %s21, 0
      %p62 = por %p60, %p61
      %p63 = scmp.ne.s32.totalorder %s55, %s57
      %p64 = scmp.eq.s32.totalorder %s26, 1
      %p65 = por %p63, %p64
      %p66 = scmp.ne.s32.totalorder %s57, %s58
      %p67 = scmp.eq.s32.totalorder %s26, 0
      %p68 = por %p66, %p67
      %p69 = scmp.ne.s32.totalorder %s57, %s58
      %p70 = scmp.eq.s32.totalorder %s27, 1
      %p71 = por %p69, %p70
      %p73 = scmp.ne.s32.totalorder %s58, %s72
      %p74 = scmp.eq.s32.totalorder %s27, 0
      %p75 = por %p73, %p74
      %s77 = sadd.s32 %s76, 1
      %p80 = scmp.eq.s32.totalorder %s21, 1
      %p81 = scmp.ne.s32.totalorder %s76, %s78
      %p82 = scmp.eq.s32.totalorder %s21, 0
      %p83 = por %p81, %p82
      %p84 = scmp.ne.s32.totalorder %s76, %s78
      %p85 = scmp.eq.s32.totalorder %s26, 1
      %p86 = por %p84, %p85
      %p87 = scmp.ne.s32.totalorder %s78, %s79
      %p88 = scmp.eq.s32.totalorder %s26, 0
      %p89 = por %p87, %p88
      %p90 = scmp.ne.s32.totalorder %s78, %s79
      %p91 = scmp.eq.s32.totalorder %s27, 1
      %p92 = por %p90, %p91
      %p94 = scmp.ne.s32.totalorder %s79, %s93
      %p95 = scmp.eq.s32.totalorder %s27, 0
      %p96 = por %p94, %p95
      %s98 = sadd.s32 %s97, 1
      %p101 = scmp.eq.s32.totalorder %s21, 1
      %p102 = scmp.ne.s32.totalorder %s97, %s99
      %p103 = scmp.eq.s32.totalorder %s21, 0
      %p104 = por %p102, %p103
      %p105 = scmp.ne.s32.totalorder %s97, %s99
      %p106 = scmp.eq.s32.totalorder %s26, 1
      %p107 = por %p105, %p106
      %p108 = scmp.ne.s32.totalorder %s99, %s100
      %p109 = scmp.eq.s32.totalorder %s26, 0
      %p110 = por %p108, %p109
      %p111 = scmp.ne.s32.totalorder %s99, %s100
      %p112 = scmp.eq.s32.totalorder %s27, 1
      %p113 = por %p111, %p112
      %p115 = scmp.ne.s32.totalorder %s100, %s114
      %p116 = scmp.eq.s32.totalorder %s27, 0
      %p117 = por %p115, %p116
      %s119 = sadd.s32 %s118, 1
      %p122 = scmp.eq.s32.totalorder %s21, 1
      %p123 = scmp.ne.s32.totalorder %s118, %s120
      %p124 = scmp.eq.s32.totalorder %s21, 0
      %p125 = por %p123, %p124
      %p126 = scmp.ne.s32.totalorder %s118, %s120
      %p127 = scmp.eq.s32.totalorder %s26, 1
      %p128 = por %p126, %p127
      %p129 = scmp.ne.s32.totalorder %s120, %s121
      %p130 = scmp.eq.s32.totalorder %s26, 0
      %p131 = por %p129, %p130
      %p132 = scmp.ne.s32.totalorder %s120, %s121
      %p133 = scmp.eq.s32.totalorder %s27, 1
      %p134 = por %p132, %p133
      %p136 = scmp.ne.s32.totalorder %s121, %s135
      %p137 = scmp.eq.s32.totalorder %s27, 0
      %p138 = por %p136, %p137
      %s140 = sadd.s32 %s139, 1
      %p143 = scmp.eq.s32.totalorder %s21, 1
      %p144 = scmp.ne.s32.totalorder %s139, %s141
      %p145 = scmp.eq.s32.totalorder %s21, 0
      %p146 = por %p144, %p145
      %p147 = scmp.ne.s32.totalorder %s139, %s141
      %p148 = scmp.eq.s32.totalorder %s26, 1
      %p149 = por %p147, %p148
      %p150 = scmp.ne.s32.totalorder %s141, %s142
      %p151 = scmp.eq.s32.totalorder %s26, 0
      %p152 = por %p150, %p151
      %p153 = scmp.ne.s32.totalorder %s141, %s142
      %p154 = scmp.eq.s32.totalorder %s27, 1
      %p155 = por %p153, %p154
      %p157 = scmp.ne.s32.totalorder %s142, %s156
      %p158 = scmp.eq.s32.totalorder %s27, 0
      %p159 = por %p157, %p158
      %s161 = sadd.s32 %s160, 1
      %p164 = scmp.eq.s32.totalorder %s21, 1
      %p165 = scmp.ne.s32.totalorder %s160, %s162
      %p166 = scmp.eq.s32.totalorder %s21, 0
      %p167 = por %p165, %p166
      %p168 = scmp.ne.s32.totalorder %s160, %s162
      %p169 = scmp.eq.s32.totalorder %s26, 1
      %p170 = por %p168, %p169
      %p171 = scmp.ne.s32.totalorder %s162, %s163
      %p172 = scmp.eq.s32.totalorder %s26, 0
      %p173 = por %p171, %p172
      %p174 = scmp.ne.s32.totalorder %s162, %s163
      %p175 = scmp.eq.s32.totalorder %s27, 1
      %p176 = por %p174, %p175
      %p178 = scmp.ne.s32.totalorder %s163, %s177
      %p179 = scmp.eq.s32.totalorder %s27, 0
      %p180 = por %p178, %p179
      %s181 = ssub.s32 %s21, %s28
      %p182 = scmp.eq.s32.totalorder %s181, 0
      %s184 = sadd.s32 %s183, 1
      %s185 = scalar_select %p182, %s183, %s184
      %p188 = pneg %p182
      %p189 = scmp.eq.s32.totalorder %s21, 1
      %p190 = por %p188, %p189
      %p191 = scmp.ne.s32.totalorder %s183, %s186
      %p192 = scmp.eq.s32.totalorder %s21, 0
      %p193 = por %p191, %p192
      %p194 = scmp.ne.s32.totalorder %s183, %s186
      %p195 = scmp.eq.s32.totalorder %s26, 1
      %p196 = por %p194, %p195
      %p197 = scmp.ne.s32.totalorder %s186, %s187
      %p198 = scmp.eq.s32.totalorder %s26, 0
      %p199 = por %p197, %p198
      %p200 = scmp.ne.s32.totalorder %s186, %s187
      %p201 = scmp.eq.s32.totalorder %s27, 1
      %p202 = por %p200, %p201
      %p204 = scmp.ne.s32.totalorder %s187, %s203
      %p205 = scmp.eq.s32.totalorder %s27, 0
      %p206 = por %p204, %p205
      %p207 = scmp.le.s32.totalorder 1, %s21
      %p208 = scmp.lt.s32.totalorder %s21, 3
      %p209 = pnand %p207, %p208
      %p210 = pneg %p209
      // Predicated region
      $region9: #{tpu_custom_call.1} parent=5 // pred_check
        _
      $region10: #{tpu_custom_call.1} parent=5 // pred_check_branch
        %212 = sbr.rel (%p209) target = $region12
      $region11: #{tpu_custom_call.1} parent=5 // pred_region
        %s213 = ssub.s32 %s21, 1
        // Predicated region
        $region13: #{tpu_custom_call.1} parent=11 // pred_check
          %p214 = pneg %p68
        $region14: #{tpu_custom_call.1} parent=11 // pred_check_branch
          %216 = sbr.rel (%p214) target = $region16
        $region15: #{tpu_custom_call.1} parent=11 // pred_region
          %s218 = ssub.s32 1024, 1024
          %219 = vsyncadd [#allocation6], %s218
          %s220 = sshll.u32 [#allocation5], 4
          %s221 = int_to_ptr.vmem [resolvable:$true] %s220
          %226 = dma.hbm_to_vmem [thread:$0]  %s1, 1024, %s221, [#allocation6], 64, 64, 4
        $region16: #{tpu_custom_call.1} parent=11 // pred_fallthru
          _
        // Predicated region
        $region17: #{tpu_custom_call.1} parent=11 // pred_check
          %p227 = pneg %p89
        $region18: #{tpu_custom_call.1} parent=11 // pred_check_branch
          %229 = sbr.rel (%p227) target = $region20
        $region19: #{tpu_custom_call.1} parent=11 // pred_region
          _
        $region20: #{tpu_custom_call.1} parent=11 // pred_fallthru
          _
        // Predicated region
        $region21: #{tpu_custom_call.1} parent=11 // pred_check
          %p230 = pneg %p110
        $region22: #{tpu_custom_call.1} parent=11 // pred_check_branch
          %232 = sbr.rel (%p230) target = $region24
        $region23: #{tpu_custom_call.1} parent=11 // pred_region
          %s234 = ssub.s32 1024, 1024
          %235 = vsyncadd [#allocation6], %s234
          %s236 = sshll.u32 [#allocation7], 4
          %s237 = int_to_ptr.vmem [resolvable:$true] %s236
          %242 = dma.hbm_to_vmem [thread:$0]  %s3, 1024, %s237, [#allocation6], 64, 64, 4
        $region24: #{tpu_custom_call.1} parent=11 // pred_fallthru
          _
        // Predicated region
        $region25: #{tpu_custom_call.1} parent=11 // pred_check
          %p243 = pneg %p131
        $region26: #{tpu_custom_call.1} parent=11 // pred_check_branch
          %245 = sbr.rel (%p243) target = $region28
        $region27: #{tpu_custom_call.1} parent=11 // pred_region
          _
        $region28: #{tpu_custom_call.1} parent=11 // pred_fallthru
          _
        // Predicated region
        $region29: #{tpu_custom_call.1} parent=11 // pred_check
          %p246 = pneg %p152
        $region30: #{tpu_custom_call.1} parent=11 // pred_check_branch
          %248 = sbr.rel (%p246) target = $region32
        $region31: #{tpu_custom_call.1} parent=11 // pred_region
          %s250 = ssub.s32 1024, 1024
          %251 = vsyncadd [#allocation9], %s250
          %s252 = sshll.u32 [#allocation8], 4
          %s253 = int_to_ptr.vmem [resolvable:$true] %s252
          %258 = dma.hbm_to_vmem [thread:$0]  %s5, 1024, %s253, [#allocation9], 64, 64, 4
        $region32: #{tpu_custom_call.1} parent=11 // pred_fallthru
          _
        // Predicated region
        $region33: #{tpu_custom_call.1} parent=11 // pred_check
          %p259 = pneg %p173
        $region34: #{tpu_custom_call.1} parent=11 // pred_check_branch
          %261 = sbr.rel (%p259) target = $region36
        $region35: #{tpu_custom_call.1} parent=11 // pred_region
          _
        $region36: #{tpu_custom_call.1} parent=11 // pred_fallthru
          _
      $region12: #{tpu_custom_call.1} parent=5 // pred_fallthru
        _
      %p262 = scmp.lt.s32.totalorder %s21, 2
      // Predicated region
      $region37: #{tpu_custom_call.1} parent=5 // pred_check
        %p263 = pneg %p262
      $region38: #{tpu_custom_call.1} parent=5 // pred_check_branch
        %265 = sbr.rel (%p263) target = $region40
      $region39: #{tpu_custom_call.1} parent=5 // pred_region
        // Predicated region
        $region41: #{tpu_custom_call.1} parent=39 // pred_check
          %p266 = pneg %p41
        $region42: #{tpu_custom_call.1} parent=39 // pred_check_branch
          %268 = sbr.rel (%p266) target = $region44
        $region43: #{tpu_custom_call.1} parent=39 // pred_region
          %s269 = sand.u32 %s31, 1
          %s270 = scalar_lea.sflag [#allocation3], %s269
          %s271 = sand.u32 %s31, 1
          %s272 = smul.addr %s271, 64
          %s273 = scalar_lea.vmem [#allocation2], %s272
          %s274 = smul.u32 16, %s21
          %s276 = ssub.s32 1024, 1024
          %277 = vsyncadd %s270, %s276
          %s278 = smul.addr %s274, 64
          %s279 = scalar_lea.hbm %s0, %s278
          %s280 = sshll.u32 %s273, 4
          %s281 = int_to_ptr.vmem [resolvable:$true] %s280
          %286 = dma.hbm_to_vmem [thread:$0]  %s279, 1024, %s281, %s270, 64, 64, 4
        $region44: #{tpu_custom_call.1} parent=39 // pred_fallthru
          _
      $region40: #{tpu_custom_call.1} parent=5 // pred_fallthru
        _
      %p287 = scmp.le.s32.totalorder 1, %s21
      %p288 = scmp.lt.s32.totalorder %s21, 3
      %p289 = pnand %p287, %p288
      %p290 = pneg %p289
      // Predicated region
      $region45: #{tpu_custom_call.1} parent=5 // pred_check
        _
      $region46: #{tpu_custom_call.1} parent=5 // pred_check_branch
        %292 = sbr.rel (%p289) target = $region48
      $region47: #{tpu_custom_call.1} parent=5 // pred_region
        %s293 = ssub.s32 %s21, 1
        %s294 = sand.u32 %s34, 1
        %s295 = scalar_lea.sflag [#allocation3], %s294
        %s296 = sand.u32 %s34, 1
        %s297 = smul.addr %s296, 64
        %s298 = scalar_lea.vmem [#allocation2], %s297
        // Predicated region
        $region49: #{tpu_custom_call.1} parent=47 // pred_check
          %p299 = pneg %p47
        $region50: #{tpu_custom_call.1} parent=47 // pred_check_branch
          %301 = sbr.rel (%p299) target = $region52
        $region51: #{tpu_custom_call.1} parent=47 // pred_region
          %302 = dma.done %s295, 1024
        $region52: #{tpu_custom_call.1} parent=47 // pred_fallthru
          _
        // Predicated region
        $region53: #{tpu_custom_call.1} parent=47 // pred_check
          %p303 = pneg %p68
        $region54: #{tpu_custom_call.1} parent=47 // pred_check_branch
          %305 = sbr.rel (%p303) target = $region56
        $region55: #{tpu_custom_call.1} parent=47 // pred_region
          %306 = dma.done [#allocation6], 1024
        $region56: #{tpu_custom_call.1} parent=47 // pred_fallthru
          _
        // Predicated region
        $region57: #{tpu_custom_call.1} parent=47 // pred_check
          %p307 = pneg %p110
        $region58: #{tpu_custom_call.1} parent=47 // pred_check_branch
          %309 = sbr.rel (%p307) target = $region60
        $region59: #{tpu_custom_call.1} parent=47 // pred_region
          %310 = dma.done [#allocation6], 1024
        $region60: #{tpu_custom_call.1} parent=47 // pred_fallthru
          _
        // Predicated region
        $region61: #{tpu_custom_call.1} parent=47 // pred_check
          %p311 = pneg %p152
        $region62: #{tpu_custom_call.1} parent=47 // pred_check_branch
          %313 = sbr.rel (%p311) target = $region64
        $region63: #{tpu_custom_call.1} parent=47 // pred_region
          %314 = dma.done [#allocation9], 1024
        $region64: #{tpu_custom_call.1} parent=47 // pred_fallthru
          _
        %s315 = sand.u32 %s34, 1
        %s316 = scalar_lea.sflag [#allocation3], %s315
        %s317 = sand.u32 %s34, 1
        %s318 = smul.addr %s317, 64
        %s319 = scalar_lea.vmem [#allocation2], %s318
        %p320 = pneg %p47
        %p321 = pneg %p44
        %p322 = pneg %p68
        %p323 = pneg %p65
        %p324 = pneg %p89
        %p325 = pneg %p86
        %p326 = pneg %p110
        %p327 = pneg %p107
        %p328 = pneg %p131
        %p329 = pneg %p128
        %p330 = pneg %p152
        %p331 = pneg %p149
        %p332 = pneg %p173
        %p333 = pneg %p170
        %p334 = pneg %p199
        %p335 = pneg %p196
        %s336 = sand.u32 %s186, 1
        %s337 = scalar_lea.sflag [#allocation4], %s336
        %s338 = sand.u32 %s186, 1
        %s339 = smul.addr %s338, 128
        %s340 = scalar_lea.vmem [#allocation10], %s339
        %s341 = smul.u32 16, %s26
        %s342 = smul.u32 16, %s26
        %v344 = vld [vmem:[%s298] sm:$0xf]
        %v345 = vld [vmem:[%s298 + $0x4] sm:$0xf]
        %v346 = vld [vmem:[%s298 + $0x8] sm:$0xf]
        %v347 = vld [vmem:[%s298 + $0xc] sm:$0xf]
        %v348 = vld [vmem:[%s298 + $0x10] sm:$0xf]
        %v349 = vld [vmem:[%s298 + $0x14] sm:$0xf]
        %v350 = vld [vmem:[%s298 + $0x18] sm:$0xf]
        %v351 = vld [vmem:[%s298 + $0x1c] sm:$0xf]
        %v352 = vld [vmem:[%s298 + $0x20] sm:$0xf]
        %v353 = vld [vmem:[%s298 + $0x24] sm:$0xf]
        %v354 = vld [vmem:[%s298 + $0x28] sm:$0xf]
        %v355 = vld [vmem:[%s298 + $0x2c] sm:$0xf]
        %v356 = vld [vmem:[%s298 + $0x30] sm:$0xf]
        %v357 = vld [vmem:[%s298 + $0x34] sm:$0xf]
        %v358 = vld [vmem:[%s298 + $0x38] sm:$0xf]
        %v359 = vld [vmem:[%s298 + $0x3c] sm:$0xf]
        %v360 = vld [vmem:[#allocation5] sm:$0xf]
        %v361 = vld [vmem:[#allocation5 + $0x4] sm:$0xf]
        %v362 = vld [vmem:[#allocation5 + $0x8] sm:$0xf]
        %v363 = vld [vmem:[#allocation5 + $0xc] sm:$0xf]
        %v364 = vld [vmem:[#allocation5 + $0x10] sm:$0xf]
        %v365 = vld [vmem:[#allocation5 + $0x14] sm:$0xf]
        %v366 = vld [vmem:[#allocation5 + $0x18] sm:$0xf]
        %v367 = vld [vmem:[#allocation5 + $0x1c] sm:$0xf]
        %v368 = vld [vmem:[#allocation5 + $0x20] sm:$0xf]
        %v369 = vld [vmem:[#allocation5 + $0x24] sm:$0xf]
        %v370 = vld [vmem:[#allocation5 + $0x28] sm:$0xf]
        %v371 = vld [vmem:[#allocation5 + $0x2c] sm:$0xf]
        %v372 = vld [vmem:[#allocation5 + $0x30] sm:$0xf]
        %v373 = vld [vmem:[#allocation5 + $0x34] sm:$0xf]
        %v374 = vld [vmem:[#allocation5 + $0x38] sm:$0xf]
        %v375 = vld [vmem:[#allocation5 + $0x3c] sm:$0xf]
        %v376 = vld [vmem:[%s2] sm:$0x1]
        %v378 = vlaneseq
        %v379 = vshrl.u32 %v378, 7
        %v380 = vsub.s32 0, %v379
        %v381 = vrot.slane %v376, %v380
        %v399 = vunpack.c.l.b16 %v344
        %v400 = vunpack.c.l.b16 %v345
        %v401 = vunpack.c.l.b16 %v346
        %v402 = vunpack.c.l.b16 %v347
        %v403 = vunpack.c.l.b16 %v348
        %v404 = vunpack.c.l.b16 %v349
        %v405 = vunpack.c.l.b16 %v350
        %v406 = vunpack.c.l.b16 %v351
        %v407 = vunpack.c.l.b16 %v352
        %v408 = vunpack.c.l.b16 %v353
        %v409 = vunpack.c.l.b16 %v354
        %v410 = vunpack.c.l.b16 %v355
        %v411 = vunpack.c.l.b16 %v356
        %v412 = vunpack.c.l.b16 %v357
        %v413 = vunpack.c.l.b16 %v358
        %v414 = vunpack.c.l.b16 %v359
        %v415 = vpack.c.b16 %v400, %v399
        %v416 = vpack.c.b16 %v402, %v401
        %v417 = vpack.c.b16 %v404, %v403
        %v418 = vpack.c.b16 %v406, %v405
        %v419 = vpack.c.b16 %v408, %v407
        %v420 = vpack.c.b16 %v410, %v409
        %v421 = vpack.c.b16 %v412, %v411
        %v422 = vpack.c.b16 %v414, %v413
        %v447 = vunpack.c.l.b16 %v360
        %v448 = vunpack.c.l.b16 %v361
        %v449 = vunpack.c.l.b16 %v362
        %v450 = vunpack.c.l.b16 %v363
        %v451 = vunpack.c.l.b16 %v364
        %v452 = vunpack.c.l.b16 %v365
        %v453 = vunpack.c.l.b16 %v366
        %v454 = vunpack.c.l.b16 %v367
        %v455 = vunpack.c.l.b16 %v368
        %v456 = vunpack.c.l.b16 %v369
        %v457 = vunpack.c.l.b16 %v370
        %v458 = vunpack.c.l.b16 %v371
        %v459 = vunpack.c.l.b16 %v372
        %v460 = vunpack.c.l.b16 %v373
        %v461 = vunpack.c.l.b16 %v374
        %v462 = vunpack.c.l.b16 %v375
        %v463 = vpack.c.b16 %v448, %v447
        %v464 = vpack.c.b16 %v450, %v449
        %v465 = vpack.c.b16 %v452, %v451
        %v466 = vpack.c.b16 %v454, %v453
        %v467 = vpack.c.b16 %v456, %v455
        %v468 = vpack.c.b16 %v458, %v457
        %v469 = vpack.c.b16 %v460, %v459
        %v470 = vpack.c.b16 %v462, %v461
        %479 = vmatprep.subr.bf16.mxu0 0
        %480 = vmatpush1.bf16.msra.mxu0 %v463
        %481 = vmatprep.subr.bf16.mxu0 0
        %482 = vmatpush1.bf16.msra.mxu0 %v464
        %483 = vmatprep.subr.bf16.mxu0 0
        %484 = vmatpush1.bf16.msra.mxu0 %v465
        %485 = vmatprep.subr.bf16.mxu0 0
        %486 = vmatpush1.bf16.msra.mxu0 %v466
        %487 = vmatprep.subr.bf16.mxu0 0
        %488 = vmatpush1.bf16.msra.mxu0 %v467
        %489 = vmatprep.subr.bf16.mxu0 0
        %490 = vmatpush1.bf16.msra.mxu0 %v468
        %491 = vmatprep.subr.bf16.mxu0 0
        %492 = vmatpush1.bf16.msra.mxu0 %v469
        %493 = vmatprep.subr.bf16.mxu0 0
        %494 = vmatpush1.bf16.msra.mxu0 %v470
        %495 = vmatprep.subr.bf16.mxu0 0
        %496 = vmatpush1.bf16.msra.mxu0 0
        %497 = vmatprep.subr.bf16.mxu0 0
        %498 = vmatpush1.bf16.msra.mxu0 0
        %499 = vmatprep.subr.bf16.mxu0 0
        %500 = vmatpush1.bf16.msra.mxu0 0
        %501 = vmatprep.subr.bf16.mxu0 0
        %502 = vmatpush1.bf16.msra.mxu0 0
        %503 = vmatprep.subr.bf16.mxu0 0
        %504 = vmatpush1.bf16.msra.mxu0 0
        %505 = vmatprep.subr.bf16.mxu0 0
        %506 = vmatpush1.bf16.msra.mxu0 0
        %507 = vmatprep.subr.bf16.mxu0 0
        %508 = vmatpush1.bf16.msra.mxu0 0
        %509 = vmatprep.subr.bf16.mxu0 0
        %510 = vmatpush1.bf16.msra.mxu0 0
        %511 = vmatprep.mubr.bf16.mxu0 0
        %512 = vmatmul.mubr.bf16.gmra.mrb[0].mxu0 %v415
        %v513 = vpop.f32.mrb[0].mxu0
        %v514 = vadd.f32 %v381, %v513
        %v515 = vpop.f32.mrb[0].mxu0
        %v516 = vpop.f32.mrb[0].mxu0
        %v517 = vadd.f32 %v381, %v516
        %v518 = vpop.f32.mrb[0].mxu0
        %519 = vmatprep.mubr.bf16.mxu0 0
        %520 = vmatmul.mubr.bf16.gmra.mrb[0].mxu0 %v416
        %v521 = vpop.f32.mrb[0].mxu0
        %v522 = vadd.f32 %v381, %v521
        %v523 = vpop.f32.mrb[0].mxu0
        %v524 = vpop.f32.mrb[0].mxu0
        %v525 = vadd.f32 %v381, %v524
        %v526 = vpop.f32.mrb[0].mxu0
        %527 = vmatprep.mubr.bf16.mxu0 0
        %528 = vmatmul.mubr.bf16.gmra.mrb[0].mxu0 %v417
        %v529 = vpop.f32.mrb[0].mxu0
        %v530 = vadd.f32 %v381, %v529
        %v531 = vpop.f32.mrb[0].mxu0
        %v532 = vpop.f32.mrb[0].mxu0
        %v533 = vadd.f32 %v381, %v532
        %v534 = vpop.f32.mrb[0].mxu0
        %535 = vmatprep.mubr.bf16.mxu0 0
        %536 = vmatmul.mubr.bf16.gmra.mrb[0].mxu0 %v418
        %v537 = vpop.f32.mrb[0].mxu0
        %v538 = vadd.f32 %v381, %v537
        %v539 = vpop.f32.mrb[0].mxu0
        %v540 = vpop.f32.mrb[0].mxu0
        %v541 = vadd.f32 %v381, %v540
        %v542 = vpop.f32.mrb[0].mxu0
        %543 = vmatprep.mubr.bf16.mxu0 0
        %544 = vmatmul.mubr.bf16.gmra.mrb[0].mxu0 %v419
        %v545 = vpop.f32.mrb[0].mxu0
        %v546 = vadd.f32 %v381, %v545
        %v547 = vpop.f32.mrb[0].mxu0
        %v548 = vpop.f32.mrb[0].mxu0
        %v549 = vadd.f32 %v381, %v548
        %v550 = vpop.f32.mrb[0].mxu0
        %551 = vmatprep.mubr.bf16.mxu0 0
        %552 = vmatmul.mubr.bf16.gmra.mrb[0].mxu0 %v420
        %v553 = vpop.f32.mrb[0].mxu0
        %v554 = vadd.f32 %v381, %v553
        %v555 = vpop.f32.mrb[0].mxu0
        %v556 = vpop.f32.mrb[0].mxu0
        %v557 = vadd.f32 %v381, %v556
        %v558 = vpop.f32.mrb[0].mxu0
        %559 = vmatprep.mubr.bf16.mxu0 0
        %560 = vmatmul.mubr.bf16.gmra.mrb[0].mxu0 %v421
        %v561 = vpop.f32.mrb[0].mxu0
        %v562 = vadd.f32 %v381, %v561
        %v563 = vpop.f32.mrb[0].mxu0
        %v564 = vpop.f32.mrb[0].mxu0
        %v565 = vadd.f32 %v381, %v564
        %v566 = vpop.f32.mrb[0].mxu0
        %567 = vmatprep.mubr.bf16.mxu0 0
        %568 = vmatmul.mubr.bf16.gmra.mrb[0].mxu0 %v422
        %v569 = vpop.f32.mrb[0].mxu0
        %v570 = vadd.f32 %v381, %v569
        %v571 = vpop.f32.mrb[0].mxu0
        %v572 = vpop.f32.mrb[0].mxu0
        %v573 = vadd.f32 %v381, %v572
        %v574 = vpop.f32.mrb[0].mxu0
        %575 = vdwg.mxu0
        %vm576 = vcmp.ge.f32.partialorder %v514, 0.0
        %vm577 = vcmp.ge.f32.partialorder %v517, 0.0
        %vm578 = vcmp.ge.f32.partialorder %v522, 0.0
        %vm579 = vcmp.ge.f32.partialorder %v525, 0.0
        %vm580 = vcmp.ge.f32.partialorder %v530, 0.0
        %vm581 = vcmp.ge.f32.partialorder %v533, 0.0
        %vm582 = vcmp.ge.f32.partialorder %v538, 0.0
        %vm583 = vcmp.ge.f32.partialorder %v541, 0.0
        %vm584 = vcmp.ge.f32.partialorder %v546, 0.0
        %vm585 = vcmp.ge.f32.partialorder %v549, 0.0
        %vm586 = vcmp.ge.f32.partialorder %v554, 0.0
        %vm587 = vcmp.ge.f32.partialorder %v557, 0.0
        %vm588 = vcmp.ge.f32.partialorder %v562, 0.0
        %vm589 = vcmp.ge.f32.partialorder %v565, 0.0
        %vm590 = vcmp.ge.f32.partialorder %v570, 0.0
        %vm591 = vcmp.ge.f32.partialorder %v573, 0.0
        %v592 = vmul.f32 %v514, 0.2
        %v593 = vmul.f32 %v517, 0.2
        %v594 = vmul.f32 %v522, 0.2
        %v595 = vmul.f32 %v525, 0.2
        %v596 = vmul.f32 %v530, 0.2
        %v597 = vmul.f32 %v533, 0.2
        %v598 = vmul.f32 %v538, 0.2
        %v599 = vmul.f32 %v541, 0.2
        %v600 = vmul.f32 %v546, 0.2
        %v601 = vmul.f32 %v549, 0.2
        %v602 = vmul.f32 %v554, 0.2
        %v603 = vmul.f32 %v557, 0.2
        %v604 = vmul.f32 %v562, 0.2
        %v605 = vmul.f32 %v565, 0.2
        %v606 = vmul.f32 %v570, 0.2
        %v607 = vmul.f32 %v573, 0.2
        %v608 = vsel %vm576, %v514, %v592
        %v609 = vsel %vm577, %v517, %v593
        %v610 = vsel %vm578, %v522, %v594
        %v611 = vsel %vm579, %v525, %v595
        %v612 = vsel %vm580, %v530, %v596
        %v613 = vsel %vm581, %v533, %v597
        %v614 = vsel %vm582, %v538, %v598
        %v615 = vsel %vm583, %v541, %v599
        %v616 = vsel %vm584, %v546, %v600
        %v617 = vsel %vm585, %v549, %v601
        %v618 = vsel %vm586, %v554, %v602
        %v619 = vsel %vm587, %v557, %v603
        %v620 = vsel %vm588, %v562, %v604
        %v621 = vsel %vm589, %v565, %v605
        %v622 = vsel %vm590, %v570, %v606
        %v623 = vsel %vm591, %v573, %v607
        %v624 = vld [vmem:[#allocation7] sm:$0xf]
        %v625 = vld [vmem:[#allocation7 + $0x4] sm:$0xf]
        %v626 = vld [vmem:[#allocation7 + $0x8] sm:$0xf]
        %v627 = vld [vmem:[#allocation7 + $0xc] sm:$0xf]
        %v628 = vld [vmem:[#allocation7 + $0x10] sm:$0xf]
        %v629 = vld [vmem:[#allocation7 + $0x14] sm:$0xf]
        %v630 = vld [vmem:[#allocation7 + $0x18] sm:$0xf]
        %v631 = vld [vmem:[#allocation7 + $0x1c] sm:$0xf]
        %v632 = vld [vmem:[#allocation7 + $0x20] sm:$0xf]
        %v633 = vld [vmem:[#allocation7 + $0x24] sm:$0xf]
        %v634 = vld [vmem:[#allocation7 + $0x28] sm:$0xf]
        %v635 = vld [vmem:[#allocation7 + $0x2c] sm:$0xf]
        %v636 = vld [vmem:[#allocation7 + $0x30] sm:$0xf]
        %v637 = vld [vmem:[#allocation7 + $0x34] sm:$0xf]
        %v638 = vld [vmem:[#allocation7 + $0x38] sm:$0xf]
        %v639 = vld [vmem:[#allocation7 + $0x3c] sm:$0xf]
        %v640 = vld [vmem:[%s4] sm:$0x1]
        %v641 = vpack.c.bf16 %v609, %v608
        %v642 = vpack.c.bf16 %v611, %v610
        %v643 = vpack.c.bf16 %v613, %v612
        %v644 = vpack.c.bf16 %v615, %v614
        %v645 = vpack.c.bf16 %v617, %v616
        %v646 = vpack.c.bf16 %v619, %v618
        %v647 = vpack.c.bf16 %v621, %v620
        %v648 = vpack.c.bf16 %v623, %v622
        %v650 = vlaneseq
        %v651 = vshrl.u32 %v650, 7
        %v652 = vsub.s32 0, %v651
        %v653 = vrot.slane %v640, %v652
        %v671 = vunpack.c.l.b16 %v624
        %v672 = vunpack.c.l.b16 %v625
        %v673 = vunpack.c.l.b16 %v626
        %v674 = vunpack.c.l.b16 %v627
        %v675 = vunpack.c.l.b16 %v628
        %v676 = vunpack.c.l.b16 %v629
        %v677 = vunpack.c.l.b16 %v630
        %v678 = vunpack.c.l.b16 %v631
        %v679 = vunpack.c.l.b16 %v632
        %v680 = vunpack.c.l.b16 %v633
        %v681 = vunpack.c.l.b16 %v634
        %v682 = vunpack.c.l.b16 %v635
        %v683 = vunpack.c.l.b16 %v636
        %v684 = vunpack.c.l.b16 %v637
        %v685 = vunpack.c.l.b16 %v638
        %v686 = vunpack.c.l.b16 %v639
        %v687 = vpack.c.b16 %v672, %v671
        %v688 = vpack.c.b16 %v674, %v673
        %v689 = vpack.c.b16 %v676, %v675
        %v690 = vpack.c.b16 %v678, %v677
        %v691 = vpack.c.b16 %v680, %v679
        %v692 = vpack.c.b16 %v682, %v681
        %v693 = vpack.c.b16 %v684, %v683
        %v694 = vpack.c.b16 %v686, %v685
        %703 = vmatprep.subr.bf16.mxu0 0
        %704 = vmatpush1.bf16.msra.mxu0 %v687
        %705 = vmatprep.subr.bf16.mxu0 0
        %706 = vmatpush1.bf16.msra.mxu0 %v688
        %707 = vmatprep.subr.bf16.mxu0 0
        %708 = vmatpush1.bf16.msra.mxu0 %v689
        %709 = vmatprep.subr.bf16.mxu0 0
        %710 = vmatpush1.bf16.msra.mxu0 %v690
        %711 = vmatprep.subr.bf16.mxu0 0
        %712 = vmatpush1.bf16.msra.mxu0 %v691
        %713 = vmatprep.subr.bf16.mxu0 0
        %714 = vmatpush1.bf16.msra.mxu0 %v692
        %715 = vmatprep.subr.bf16.mxu0 0
        %716 = vmatpush1.bf16.msra.mxu0 %v693
        %717 = vmatprep.subr.bf16.mxu0 0
        %718 = vmatpush1.bf16.msra.mxu0 %v694
        %719 = vmatprep.subr.bf16.mxu0 0
        %720 = vmatpush1.bf16.msra.mxu0 0
        %721 = vmatprep.subr.bf16.mxu0 0
        %722 = vmatpush1.bf16.msra.mxu0 0
        %723 = vmatprep.subr.bf16.mxu0 0
        %724 = vmatpush1.bf16.msra.mxu0 0
        %725 = vmatprep.subr.bf16.mxu0 0
        %726 = vmatpush1.bf16.msra.mxu0 0
        %727 = vmatprep.subr.bf16.mxu0 0
        %728 = vmatpush1.bf16.msra.mxu0 0
        %729 = vmatprep.subr.bf16.mxu0 0
        %730 = vmatpush1.bf16.msra.mxu0 0
        %731 = vmatprep.subr.bf16.mxu0 0
        %732 = vmatpush1.bf16.msra.mxu0 0
        %733 = vmatprep.subr.bf16.mxu0 0
        %734 = vmatpush1.bf16.msra.mxu0 0
        %735 = vmatprep.mubr.bf16.mxu0 0
        %736 = vmatmul.mubr.bf16.gmra.mrb[0].mxu0 %v641
        %v737 = vpop.f32.mrb[0].mxu0
        %v738 = vadd.f32 %v653, %v737
        %v739 = vpop.f32.mrb[0].mxu0
        %v740 = vpop.f32.mrb[0].mxu0
        %v741 = vadd.f32 %v653, %v740
        %v742 = vpop.f32.mrb[0].mxu0
        %743 = vmatprep.mubr.bf16.mxu0 0
        %744 = vmatmul.mubr.bf16.gmra.mrb[0].mxu0 %v642
        %v745 = vpop.f32.mrb[0].mxu0
        %v746 = vadd.f32 %v653, %v745
        %v747 = vpop.f32.mrb[0].mxu0
        %v748 = vpop.f32.mrb[0].mxu0
        %v749 = vadd.f32 %v653, %v748
        %v750 = vpop.f32.mrb[0].mxu0
        %751 = vmatprep.mubr.bf16.mxu0 0
        %752 = vmatmul.mubr.bf16.gmra.mrb[0].mxu0 %v643
        %v753 = vpop.f32.mrb[0].mxu0
        %v754 = vadd.f32 %v653, %v753
        %v755 = vpop.f32.mrb[0].mxu0
        %v756 = vpop.f32.mrb[0].mxu0
        %v757 = vadd.f32 %v653, %v756
        %v758 = vpop.f32.mrb[0].mxu0
        %759 = vmatprep.mubr.bf16.mxu0 0
        %760 = vmatmul.mubr.bf16.gmra.mrb[0].mxu0 %v644
        %v761 = vpop.f32.mrb[0].mxu0
        %v762 = vadd.f32 %v653, %v761
        %v763 = vpop.f32.mrb[0].mxu0
        %v764 = vpop.f32.mrb[0].mxu0
        %v765 = vadd.f32 %v653, %v764
        %v766 = vpop.f32.mrb[0].mxu0
        %767 = vmatprep.mubr.bf16.mxu0 0
        %768 = vmatmul.mubr.bf16.gmra.mrb[0].mxu0 %v645
        %v769 = vpop.f32.mrb[0].mxu0
        %v770 = vadd.f32 %v653, %v769
        %v771 = vpop.f32.mrb[0].mxu0
        %v772 = vpop.f32.mrb[0].mxu0
        %v773 = vadd.f32 %v653, %v772
        %v774 = vpop.f32.mrb[0].mxu0
        %775 = vmatprep.mubr.bf16.mxu0 0
        %776 = vmatmul.mubr.bf16.gmra.mrb[0].mxu0 %v646
        %v777 = vpop.f32.mrb[0].mxu0
        %v778 = vadd.f32 %v653, %v777
        %v779 = vpop.f32.mrb[0].mxu0
        %v780 = vpop.f32.mrb[0].mxu0
        %v781 = vadd.f32 %v653, %v780
        %v782 = vpop.f32.mrb[0].mxu0
        %783 = vmatprep.mubr.bf16.mxu0 0
        %784 = vmatmul.mubr.bf16.gmra.mrb[0].mxu0 %v647
        %v785 = vpop.f32.mrb[0].mxu0
        %v786 = vadd.f32 %v653, %v785
        %v787 = vpop.f32.mrb[0].mxu0
        %v788 = vpop.f32.mrb[0].mxu0
        %v789 = vadd.f32 %v653, %v788
        %v790 = vpop.f32.mrb[0].mxu0
        %791 = vmatprep.mubr.bf16.mxu0 0
        %792 = vmatmul.mubr.bf16.gmra.mrb[0].mxu0 %v648
        %v793 = vpop.f32.mrb[0].mxu0
        %v794 = vadd.f32 %v653, %v793
        %v795 = vpop.f32.mrb[0].mxu0
        %v796 = vpop.f32.mrb[0].mxu0
        %v797 = vadd.f32 %v653, %v796
        %v798 = vpop.f32.mrb[0].mxu0
        %799 = vdwg.mxu0
        %vm800 = vcmp.ge.f32.partialorder %v738, 0.0
        %vm801 = vcmp.ge.f32.partialorder %v741, 0.0
        %vm802 = vcmp.ge.f32.partialorder %v746, 0.0
        %vm803 = vcmp.ge.f32.partialorder %v749, 0.0
        %vm804 = vcmp.ge.f32.partialorder %v754, 0.0
        %vm805 = vcmp.ge.f32.partialorder %v757, 0.0
        %vm806 = vcmp.ge.f32.partialorder %v762, 0.0
        %vm807 = vcmp.ge.f32.partialorder %v765, 0.0
        %vm808 = vcmp.ge.f32.partialorder %v770, 0.0
        %vm809 = vcmp.ge.f32.partialorder %v773, 0.0
        %vm810 = vcmp.ge.f32.partialorder %v778, 0.0
        %vm811 = vcmp.ge.f32.partialorder %v781, 0.0
        %vm812 = vcmp.ge.f32.partialorder %v786, 0.0
        %vm813 = vcmp.ge.f32.partialorder %v789, 0.0
        %vm814 = vcmp.ge.f32.partialorder %v794, 0.0
        %vm815 = vcmp.ge.f32.partialorder %v797, 0.0
        %v816 = vmul.f32 %v738, 0.2
        %v817 = vmul.f32 %v741, 0.2
        %v818 = vmul.f32 %v746, 0.2
        %v819 = vmul.f32 %v749, 0.2
        %v820 = vmul.f32 %v754, 0.2
        %v821 = vmul.f32 %v757, 0.2
        %v822 = vmul.f32 %v762, 0.2
        %v823 = vmul.f32 %v765, 0.2
        %v824 = vmul.f32 %v770, 0.2
        %v825 = vmul.f32 %v773, 0.2
        %v826 = vmul.f32 %v778, 0.2
        %v827 = vmul.f32 %v781, 0.2
        %v828 = vmul.f32 %v786, 0.2
        %v829 = vmul.f32 %v789, 0.2
        %v830 = vmul.f32 %v794, 0.2
        %v831 = vmul.f32 %v797, 0.2
        %v832 = vsel %vm800, %v738, %v816
        %v833 = vsel %vm801, %v741, %v817
        %v834 = vsel %vm802, %v746, %v818
        %v835 = vsel %vm803, %v749, %v819
        %v836 = vsel %vm804, %v754, %v820
        %v837 = vsel %vm805, %v757, %v821
        %v838 = vsel %vm806, %v762, %v822
        %v839 = vsel %vm807, %v765, %v823
        %v840 = vsel %vm808, %v770, %v824
        %v841 = vsel %vm809, %v773, %v825
        %v842 = vsel %vm810, %v778, %v826
        %v843 = vsel %vm811, %v781, %v827
        %v844 = vsel %vm812, %v786, %v828
        %v845 = vsel %vm813, %v789, %v829
        %v846 = vsel %vm814, %v794, %v830
        %v847 = vsel %vm815, %v797, %v831
        %v848 = vld [vmem:[#allocation8] sm:$0xf]
        %v849 = vld [vmem:[#allocation8 + $0x4] sm:$0xf]
        %v850 = vld [vmem:[#allocation8 + $0x8] sm:$0xf]
        %v851 = vld [vmem:[#allocation8 + $0xc] sm:$0xf]
        %v852 = vld [vmem:[#allocation8 + $0x10] sm:$0xf]
        %v853 = vld [vmem:[#allocation8 + $0x14] sm:$0xf]
        %v854 = vld [vmem:[#allocation8 + $0x18] sm:$0xf]
        %v855 = vld [vmem:[#allocation8 + $0x1c] sm:$0xf]
        %v856 = vld [vmem:[#allocation8 + $0x20] sm:$0xf]
        %v857 = vld [vmem:[#allocation8 + $0x24] sm:$0xf]
        %v858 = vld [vmem:[#allocation8 + $0x28] sm:$0xf]
        %v859 = vld [vmem:[#allocation8 + $0x2c] sm:$0xf]
        %v860 = vld [vmem:[#allocation8 + $0x30] sm:$0xf]
        %v861 = vld [vmem:[#allocation8 + $0x34] sm:$0xf]
        %v862 = vld [vmem:[#allocation8 + $0x38] sm:$0xf]
        %v863 = vld [vmem:[#allocation8 + $0x3c] sm:$0xf]
        %v864 = vld [vmem:[%s6] sm:$0x1]
        %v865 = vpack.c.bf16 %v833, %v832
        %v866 = vpack.c.bf16 %v835, %v834
        %v867 = vpack.c.bf16 %v837, %v836
        %v868 = vpack.c.bf16 %v839, %v838
        %v869 = vpack.c.bf16 %v841, %v840
        %v870 = vpack.c.bf16 %v843, %v842
        %v871 = vpack.c.bf16 %v845, %v844
        %v872 = vpack.c.bf16 %v847, %v846
        %v874 = vlaneseq
        %v875 = vshrl.u32 %v874, 7
        %v876 = vsub.s32 0, %v875
        %v877 = vrot.slane %v864, %v876
        %v895 = vunpack.c.l.b16 %v848
        %v896 = vunpack.c.l.b16 %v849
        %v897 = vunpack.c.l.b16 %v850
        %v898 = vunpack.c.l.b16 %v851
        %v899 = vunpack.c.l.b16 %v852
        %v900 = vunpack.c.l.b16 %v853
        %v901 = vunpack.c.l.b16 %v854
        %v902 = vunpack.c.l.b16 %v855
        %v903 = vunpack.c.l.b16 %v856
        %v904 = vunpack.c.l.b16 %v857
        %v905 = vunpack.c.l.b16 %v858
        %v906 = vunpack.c.l.b16 %v859
        %v907 = vunpack.c.l.b16 %v860
        %v908 = vunpack.c.l.b16 %v861
        %v909 = vunpack.c.l.b16 %v862
        %v910 = vunpack.c.l.b16 %v863
        %v911 = vpack.c.b16 %v896, %v895
        %v912 = vpack.c.b16 %v898, %v897
        %v913 = vpack.c.b16 %v900, %v899
        %v914 = vpack.c.b16 %v902, %v901
        %v915 = vpack.c.b16 %v904, %v903
        %v916 = vpack.c.b16 %v906, %v905
        %v917 = vpack.c.b16 %v908, %v907
        %v918 = vpack.c.b16 %v910, %v909
        %927 = vmatprep.subr.bf16.mxu0 0
        %928 = vmatpush1.bf16.msra.mxu0 %v911
        %929 = vmatprep.subr.bf16.mxu0 0
        %930 = vmatpush1.bf16.msra.mxu0 %v912
        %931 = vmatprep.subr.bf16.mxu0 0
        %932 = vmatpush1.bf16.msra.mxu0 %v913
        %933 = vmatprep.subr.bf16.mxu0 0
        %934 = vmatpush1.bf16.msra.mxu0 %v914
        %935 = vmatprep.subr.bf16.mxu0 0
        %936 = vmatpush1.bf16.msra.mxu0 %v915
        %937 = vmatprep.subr.bf16.mxu0 0
        %938 = vmatpush1.bf16.msra.mxu0 %v916
        %939 = vmatprep.subr.bf16.mxu0 0
        %940 = vmatpush1.bf16.msra.mxu0 %v917
        %941 = vmatprep.subr.bf16.mxu0 0
        %942 = vmatpush1.bf16.msra.mxu0 %v918
        %943 = vmatprep.subr.bf16.mxu0 0
        %944 = vmatpush1.bf16.msra.mxu0 0
        %945 = vmatprep.subr.bf16.mxu0 0
        %946 = vmatpush1.bf16.msra.mxu0 0
        %947 = vmatprep.subr.bf16.mxu0 0
        %948 = vmatpush1.bf16.msra.mxu0 0
        %949 = vmatprep.subr.bf16.mxu0 0
        %950 = vmatpush1.bf16.msra.mxu0 0
        %951 = vmatprep.subr.bf16.mxu0 0
        %952 = vmatpush1.bf16.msra.mxu0 0
        %953 = vmatprep.subr.bf16.mxu0 0
        %954 = vmatpush1.bf16.msra.mxu0 0
        %955 = vmatprep.subr.bf16.mxu0 0
        %956 = vmatpush1.bf16.msra.mxu0 0
        %957 = vmatprep.subr.bf16.mxu0 0
        %958 = vmatpush1.bf16.msra.mxu0 0
        %959 = vmatprep.mubr.bf16.mxu0 0
        %960 = vmatmul.mubr.bf16.gmra.mrb[0].mxu0 %v865
        %v961 = vpop.f32.mrb[0].mxu0
        %v962 = vadd.f32 %v877, %v961
        %v963 = vpop.f32.mrb[0].mxu0
        %v964 = vpop.f32.mrb[0].mxu0
        %v965 = vadd.f32 %v877, %v964
        %v966 = vpop.f32.mrb[0].mxu0
        %967 = vmatprep.mubr.bf16.mxu0 0
        %968 = vmatmul.mubr.bf16.gmra.mrb[0].mxu0 %v866
        %v969 = vpop.f32.mrb[0].mxu0
        %v970 = vadd.f32 %v877, %v969
        %v971 = vpop.f32.mrb[0].mxu0
        %v972 = vpop.f32.mrb[0].mxu0
        %v973 = vadd.f32 %v877, %v972
        %v974 = vpop.f32.mrb[0].mxu0
        %975 = vmatprep.mubr.bf16.mxu0 0
        %976 = vmatmul.mubr.bf16.gmra.mrb[0].mxu0 %v867
        %v977 = vpop.f32.mrb[0].mxu0
        %v978 = vadd.f32 %v877, %v977
        %v979 = vpop.f32.mrb[0].mxu0
        %v980 = vpop.f32.mrb[0].mxu0
        %v981 = vadd.f32 %v877, %v980
        %v982 = vpop.f32.mrb[0].mxu0
        %983 = vmatprep.mubr.bf16.mxu0 0
        %984 = vmatmul.mubr.bf16.gmra.mrb[0].mxu0 %v868
        %v985 = vpop.f32.mrb[0].mxu0
        %v986 = vadd.f32 %v877, %v985
        %v987 = vpop.f32.mrb[0].mxu0
        %v988 = vpop.f32.mrb[0].mxu0
        %v989 = vadd.f32 %v877, %v988
        %v990 = vpop.f32.mrb[0].mxu0
        %991 = vmatprep.mubr.bf16.mxu0 0
        %992 = vmatmul.mubr.bf16.gmra.mrb[0].mxu0 %v869
        %v993 = vpop.f32.mrb[0].mxu0
        %v994 = vadd.f32 %v877, %v993
        %v995 = vpop.f32.mrb[0].mxu0
        %v996 = vpop.f32.mrb[0].mxu0
        %v997 = vadd.f32 %v877, %v996
        %v998 = vpop.f32.mrb[0].mxu0
        %999 = vmatprep.mubr.bf16.mxu0 0
        %1000 = vmatmul.mubr.bf16.gmra.mrb[0].mxu0 %v870
        %v1001 = vpop.f32.mrb[0].mxu0
        %v1002 = vadd.f32 %v877, %v1001
        %v1003 = vpop.f32.mrb[0].mxu0
        %v1004 = vpop.f32.mrb[0].mxu0
        %v1005 = vadd.f32 %v877, %v1004
        %v1006 = vpop.f32.mrb[0].mxu0
        %1007 = vmatprep.mubr.bf16.mxu0 0
        %1008 = vmatmul.mubr.bf16.gmra.mrb[0].mxu0 %v871
        %v1009 = vpop.f32.mrb[0].mxu0
        %v1010 = vadd.f32 %v877, %v1009
        %v1011 = vpop.f32.mrb[0].mxu0
        %v1012 = vpop.f32.mrb[0].mxu0
        %v1013 = vadd.f32 %v877, %v1012
        %v1014 = vpop.f32.mrb[0].mxu0
        %1015 = vmatprep.mubr.bf16.mxu0 0
        %1016 = vmatmul.mubr.bf16.gmra.mrb[0].mxu0 %v872
        %v1017 = vpop.f32.mrb[0].mxu0
        %v1018 = vadd.f32 %v877, %v1017
        %v1019 = vpop.f32.mrb[0].mxu0
        %v1020 = vpop.f32.mrb[0].mxu0
        %v1021 = vadd.f32 %v877, %v1020
        %v1022 = vpop.f32.mrb[0].mxu0
        %1023 = vdwg.mxu0
        %1024 = vst [vmem:[%s340] sm:$0xff] %v962
        %1025 = vst [vmem:[%s340 + $0x8] sm:$0xff] %v965
        %1026 = vst [vmem:[%s340 + $0x10] sm:$0xff] %v970
        %1027 = vst [vmem:[%s340 + $0x18] sm:$0xff] %v973
        %1028 = vst [vmem:[%s340 + $0x20] sm:$0xff] %v978
        %1029 = vst [vmem:[%s340 + $0x28] sm:$0xff] %v981
        %1030 = vst [vmem:[%s340 + $0x30] sm:$0xff] %v986
        %1031 = vst [vmem:[%s340 + $0x38] sm:$0xff] %v989
        %1032 = vst [vmem:[%s340 + $0x40] sm:$0xff] %v994
        %1033 = vst [vmem:[%s340 + $0x48] sm:$0xff] %v997
        %1034 = vst [vmem:[%s340 + $0x50] sm:$0xff] %v1002
        %1035 = vst [vmem:[%s340 + $0x58] sm:$0xff] %v1005
        %1036 = vst [vmem:[%s340 + $0x60] sm:$0xff] %v1010
        %1037 = vst [vmem:[%s340 + $0x68] sm:$0xff] %v1013
        %1038 = vst [vmem:[%s340 + $0x70] sm:$0xff] %v1018
        %1039 = vst [vmem:[%s340 + $0x78] sm:$0xff] %v1021
        %s1040 = sand.u32 %s186, 1
        %s1041 = scalar_lea.sflag [#allocation4], %s1040
        %s1042 = sand.u32 %s186, 1
        %s1043 = smul.addr %s1042, 128
        %s1044 = scalar_lea.vmem [#allocation10], %s1043
        // Predicated region
        $region65: #{tpu_custom_call.1} parent=47 // pred_check
          %p1045 = pneg %p196
        $region66: #{tpu_custom_call.1} parent=47 // pred_check_branch
          %1047 = sbr.rel (%p1045) target = $region68
        $region67: #{tpu_custom_call.1} parent=47 // pred_region
          %s1048 = smul.u32 16, %s26
          %s1050 = ssub.s32 2048, 2048
          %1051 = vsyncadd %s1041, %s1050
          %s1052 = smul.addr %s1048, 128
          %s1053 = scalar_lea.hbm %s7, %s1052
          %s1054 = sshll.u32 %s1044, 4
          %s1055 = int_to_ptr.vmem [resolvable:$true] %s1054
          %1060 = dma.vmem_to_hbm [thread:$0]  %s1055, 2048, %s1053, %s1041, 128, 128, 8
        $region68: #{tpu_custom_call.1} parent=47 // pred_fallthru
          _
      $region48: #{tpu_custom_call.1} parent=5 // pred_fallthru
        _
      %p1061 = scmp.le.s32.totalorder 2, %s21
      // Predicated region
      $region69: #{tpu_custom_call.1} parent=5 // pred_check
        %p1062 = pneg %p1061
      $region70: #{tpu_custom_call.1} parent=5 // pred_check_branch
        %1064 = sbr.rel (%p1062) target = $region72
      $region71: #{tpu_custom_call.1} parent=5 // pred_region
        %s1065 = ssub.s32 %s21, 2
        // Predicated region
        $region73: #{tpu_custom_call.1} parent=71 // pred_check
          %p1066 = pneg %p202
        $region74: #{tpu_custom_call.1} parent=71 // pred_check_branch
          %1068 = sbr.rel (%p1066) target = $region76
        $region75: #{tpu_custom_call.1} parent=71 // pred_region
          %s1069 = sand.u32 %s187, 1
          %s1070 = scalar_lea.sflag [#allocation4], %s1069
          %s1071 = sand.u32 %s187, 1
          %s1072 = smul.addr %s1071, 128
          %s1073 = scalar_lea.vmem [#allocation10], %s1072
          %1074 = dma.done %s1070, 2048
        $region76: #{tpu_custom_call.1} parent=71 // pred_fallthru
          _
      $region72: #{tpu_custom_call.1} parent=5 // pred_fallthru
        _
    $region6: #{tpu_custom_call.1} parent=1 // loop_footer
      %s25 = sadd.s32 1, %s21
    $region7: #{tpu_custom_call.1} parent=1 // loop_footer_branch
      %20 = sbr.rel target = $region3
    $region8: #{tpu_custom_call.1} parent=1 // loop_exit
      _
    %1075 = vsyncpa [#allocation3], 1
    %s1076 = scalar_lea.sflag [#allocation3], 1
    %1077 = vsyncpa %s1076, 1
    %1078 = vsyncpa [#allocation6], 1
    %1079 = vsyncpa [#allocation9], 1
    %1080 = vsyncpa [#allocation4], 1
    %s1081 = scalar_lea.sflag [#allocation4], 1
    %1082 = vsyncpa %s1081, 1

// kernel: tpu_custom_call.1
$region0: #{tpu_custom_call.1}
  #allocation0 [shape = 'u32[]', space=smem, size = 0x4, offset = 0x4, fixed_abs, tag = 'smem constant byte address 0x4 - core index']
  #allocation1 [shape = 'u32[144,128]{1,0:T(1,128)}', space=vmem, size = 0x12000, scoped, tag = 'internal scratch']
  %s0 = inlined_call_operand.hbm [shape: bf16[256,128], index: 0, kind: input, shape index: {}]
  %s1 = inlined_call_operand.hbm [shape: bf16[128,128], index: 1, kind: input, shape index: {}]
  %s2 = inlined_call_operand.vmem [shape: f32[1,128], index: 2, kind: input, shape index: {}]
  %s3 = inlined_call_operand.hbm [shape: bf16[128,128], index: 3, kind: input, shape index: {}]
  %s4 = inlined_call_operand.vmem [shape: f32[1,128], index: 4, kind: input, shape index: {}]
  %s5 = inlined_call_operand.hbm [shape: bf16[128,128], index: 5, kind: input, shape index: {}]
  %s6 = inlined_call_operand.vmem [shape: f32[1,128], index: 6, kind: input, shape index: {}]
  %s7 = inlined_call_operand.hbm [shape: f32[256,128], index: 7, kind: output, shape index: {}]
  %s8 = sld [smem:[#allocation0]]
  $region77: #{tpu_custom_call.1} parent=0
    _
  %s10 = ssub.s32 1, %s8
  %s11 = scalar_select 0, %s10, %s8
  $region1: #{tpu_custom_call.1} parent=0
    #allocation2 [shape = 'u8[65536]{0}', space=vmem, size = 0x10000, scoped, tag = 'input window, operand 0']
    #allocation3 [shape = 's32[2]{0}', space=sflag, size = 0x8, scoped, tag = 'scoped memory for tpu_custom_call.1']
    #allocation4 [shape = 's32[2]{0}', space=sflag, size = 0x8, scoped, tag = 'scoped memory for tpu_custom_call.1']
    #allocation5 [shape = 'u8[32768]{0}', space=vmem, size = 0x8000, scoped, tag = 'input window, operand 1, single buffered']
    #allocation6 [shape = 's32[1]{0}', space=sflag, size = 0x4, scoped, tag = 'scoped memory for tpu_custom_call.1']
    #allocation7 [shape = 'u8[32768]{0}', space=vmem, size = 0x8000, scoped, tag = 'input window, operand 3, single buffered']
    #allocation8 [shape = 'u8[32768]{0}', space=vmem, size = 0x8000, scoped, tag = 'input window, operand 5, single buffered']
    #allocation9 [shape = 's32[1]{0}', space=sflag, size = 0x4, scoped, tag = 'scoped memory for tpu_custom_call.1']
    #allocation10 [shape = 'u8[131072]{0}', space=vmem, size = 0x20000, scoped, tag = 'output window, operand 0']
    %12 = vsyncpa [#allocation3], 0
    %s13 = scalar_lea.sflag [#allocation3], 1
    %14 = vsyncpa %s13, 0
    %15 = vsyncpa [#allocation6], 0
    %16 = vsyncpa [#allocation9], 0
    %17 = vsyncpa [#allocation4], 0
    %s18 = scalar_lea.sflag [#allocation4], 1
    %19 = vsyncpa %s18, 0
    loop: start=0, step=1, limit=4
    $region2: #{tpu_custom_call.1} parent=1 // loop_pre_header
      _
    $region3: #{tpu_custom_call.1} parent=1 // loop_header
      %s21 = sphi 0, %s25
      %p22 = scmp.ge.s32.totalorder %s21, 4
      %s31 = sphi 0, %s33
      %s34 = sphi 0, %s31
      %s35 = sphi 0, %s34
      %s51 = sphi 0, %s35
      %s55 = sphi 0, %s55
      %s57 = sphi 0, %s55
      %s58 = sphi 0, %s57
      %s72 = sphi 0, %s58
      %s76 = sphi 0, %s76
      %s78 = sphi 0, %s76
      %s79 = sphi 0, %s78
      %s93 = sphi 0, %s79
      %s97 = sphi 0, %s97
      %s99 = sphi 0, %s97
      %s100 = sphi 0, %s99
      %s114 = sphi 0, %s100
      %s118 = sphi 0, %s118
      %s120 = sphi 0, %s118
      %s121 = sphi 0, %s120
      %s135 = sphi 0, %s121
      %s139 = sphi 0, %s139
      %s141 = sphi 0, %s139
      %s142 = sphi 0, %s141
      %s156 = sphi 0, %s142
      %s160 = sphi 0, %s160
      %s162 = sphi 0, %s160
      %s163 = sphi 0, %s162
      %s177 = sphi 0, %s163
      %s183 = sphi 0, %s185
      %s186 = sphi 0, %s183
      %s187 = sphi 0, %s186
      %s203 = sphi 0, %s187
    $region4: #{tpu_custom_call.1} parent=1 // loop_header_branch
      %24 = sbr.rel (%p22) target = $region8
    $region5: #{tpu_custom_call.1} parent=1 // loop_body
      %s26 = ssub.s32 %s21, 1
      %s27 = ssub.s32 %s21, 2
      %s28 = sadd.s32 %s21, 1
      %s29 = ssub.s32 %s21, %s28
      %p30 = scmp.eq.s32.totalorder %s29, 0
      %s32 = sadd.s32 %s31, 1
      %s33 = scalar_select %p30, %s31, %s32
      %p36 = pneg %p30
      %p37 = scmp.eq.s32.totalorder %s21, 1
      %p38 = por %p36, %p37
      %p39 = scmp.ne.s32.totalorder %s31, %s34
      %p40 = scmp.eq.s32.totalorder %s21, 0
      %p41 = por %p39, %p40
      %p42 = scmp.ne.s32.totalorder %s31, %s34
      %p43 = scmp.eq.s32.totalorder %s26, 1
      %p44 = por %p42, %p43
      %p45 = scmp.ne.s32.totalorder %s34, %s35
      %p46 = scmp.eq.s32.totalorder %s26, 0
      %p47 = por %p45, %p46
      %p48 = scmp.ne.s32.totalorder %s34, %s35
      %p49 = scmp.eq.s32.totalorder %s27, 1
      %p50 = por %p48, %p49
      %p52 = scmp.ne.s32.totalorder %s35, %s51
      %p53 = scmp.eq.s32.totalorder %s27, 0
      %p54 = por %p52, %p53
      %s56 = sadd.s32 %s55, 1
      %p59 = scmp.eq.s32.totalorder %s21, 1
      %p60 = scmp.ne.s32.totalorder %s55, %s57
      %p61 = scmp.eq.s32.totalorder %s21, 0
      %p62 = por %p60, %p61
      %p63 = scmp.ne.s32.totalorder %s55, %s57
      %p64 = scmp.eq.s32.totalorder %s26, 1
      %p65 = por %p63, %p64
      %p66 = scmp.ne.s32.totalorder %s57, %s58
      %p67 = scmp.eq.s32.totalorder %s26, 0
      %p68 = por %p66, %p67
      %p69 = scmp.ne.s32.totalorder %s57, %s58
      %p70 = scmp.eq.s32.totalorder %s27, 1
      %p71 = por %p69, %p70
      %p73 = scmp.ne.s32.totalorder %s58, %s72
      %p74 = scmp.eq.s32.totalorder %s27, 0
      %p75 = por %p73, %p74
      %s77 = sadd.s32 %s76, 1
      %p80 = scmp.eq.s32.totalorder %s21, 1
      %p81 = scmp.ne.s32.totalorder %s76, %s78
      %p82 = scmp.eq.s32.totalorder %s21, 0
      %p83 = por %p81, %p82
      %p84 = scmp.ne.s32.totalorder %s76, %s78
      %p85 = scmp.eq.s32.totalorder %s26, 1
      %p86 = por %p84, %p85
      %p87 = scmp.ne.s32.totalorder %s78, %s79
      %p88 = scmp.eq.s32.totalorder %s26, 0
      %p89 = por %p87, %p88
      %p90 = scmp.ne.s32.totalorder %s78, %s79
      %p91 = scmp.eq.s32.totalorder %s27, 1
      %p92 = por %p90, %p91
      %p94 = scmp.ne.s32.totalorder %s79, %s93
      %p95 = scmp.eq.s32.totalorder %s27, 0
      %p96 = por %p94, %p95
      %s98 = sadd.s32 %s97, 1
      %p101 = scmp.eq.s32.totalorder %s21, 1
      %p102 = scmp.ne.s32.totalorder %s97, %s99
      %p103 = scmp.eq.s32.totalorder %s21, 0
      %p104 = por %p102, %p103
      %p105 = scmp.ne.s32.totalorder %s97, %s99
      %p106 = scmp.eq.s32.totalorder %s26, 1
      %p107 = por %p105, %p106
      %p108 = scmp.ne.s32.totalorder %s99, %s100
      %p109 = scmp.eq.s32.totalorder %s26, 0
      %p110 = por %p108, %p109
      %p111 = scmp.ne.s32.totalorder %s99, %s100
      %p112 = scmp.eq.s32.totalorder %s27, 1
      %p113 = por %p111, %p112
      %p115 = scmp.ne.s32.totalorder %s100, %s114
      %p116 = scmp.eq.s32.totalorder %s27, 0
      %p117 = por %p115, %p116
      %s119 = sadd.s32 %s118, 1
      %p122 = scmp.eq.s32.totalorder %s21, 1
      %p123 = scmp.ne.s32.totalorder %s118, %s120
      %p124 = scmp.eq.s32.totalorder %s21, 0
      %p125 = por %p123, %p124
      %p126 = scmp.ne.s32.totalorder %s118, %s120
      %p127 = scmp.eq.s32.totalorder %s26, 1
      %p128 = por %p126, %p127
      %p129 = scmp.ne.s32.totalorder %s120, %s121
      %p130 = scmp.eq.s32.totalorder %s26, 0
      %p131 = por %p129, %p130
      %p132 = scmp.ne.s32.totalorder %s120, %s121
      %p133 = scmp.eq.s32.totalorder %s27, 1
      %p134 = por %p132, %p133
      %p136 = scmp.ne.s32.totalorder %s121, %s135
      %p137 = scmp.eq.s32.totalorder %s27, 0
      %p138 = por %p136, %p137
      %s140 = sadd.s32 %s139, 1
      %p143 = scmp.eq.s32.totalorder %s21, 1
      %p144 = scmp.ne.s32.totalorder %s139, %s141
      %p145 = scmp.eq.s32.totalorder %s21, 0
      %p146 = por %p144, %p145
      %p147 = scmp.ne.s32.totalorder %s139, %s141
      %p148 = scmp.eq.s32.totalorder %s26, 1
      %p149 = por %p147, %p148
      %p150 = scmp.ne.s32.totalorder %s141, %s142
      %p151 = scmp.eq.s32.totalorder %s26, 0
      %p152 = por %p150, %p151
      %p153 = scmp.ne.s32.totalorder %s141, %s142
      %p154 = scmp.eq.s32.totalorder %s27, 1
      %p155 = por %p153, %p154
      %p157 = scmp.ne.s32.totalorder %s142, %s156
      %p158 = scmp.eq.s32.totalorder %s27, 0
      %p159 = por %p157, %p158
      %s161 = sadd.s32 %s160, 1
      %p164 = scmp.eq.s32.totalorder %s21, 1
      %p165 = scmp.ne.s32.totalorder %s160, %s162
      %p166 = scmp.eq.s32.totalorder %s21, 0
      %p167 = por %p165, %p166
      %p168 = scmp.ne.s32.totalorder %s160, %s162
      %p169 = scmp.eq.s32.totalorder %s26, 1
      %p170 = por %p168, %p169
      %p171 = scmp.ne.s32.totalorder %s162, %s163
      %p172 = scmp.eq.s32.totalorder %s26, 0
      %p173 = por %p171, %p172
      %p174 = scmp.ne.s32.totalorder %s162, %s163
      %p175 = scmp.eq.s32.totalorder %s27, 1
      %p176 = por %p174, %p175
      %p178 = scmp.ne.s32.totalorder %s163, %s177
      %p179 = scmp.eq.s32.totalorder %s27, 0
      %p180 = por %p178, %p179
      %s181 = ssub.s32 %s21, %s28
      %p182 = scmp.eq.s32.totalorder %s181, 0
      %s184 = sadd.s32 %s183, 1
      %s185 = scalar_select %p182, %s183, %s184
      %p188 = pneg %p182
      %p189 = scmp.eq.s32.totalorder %s21, 1
      %p190 = por %p188, %p189
      %p191 = scmp.ne.s32.totalorder %s183, %s186
      %p192 = scmp.eq.s32.totalorder %s21, 0
      %p193 = por %p191, %p192
      %p194 = scmp.ne.s32.totalorder %s183, %s186
      %p195 = scmp.eq.s32.totalorder %s26, 1
      %p196 = por %p194, %p195
      %p197 = scmp.ne.s32.totalorder %s186, %s187
      %p198 = scmp.eq.s32.totalorder %s26, 0
      %p199 = por %p197, %p198
      %p200 = scmp.ne.s32.totalorder %s186, %s187
      %p201 = scmp.eq.s32.totalorder %s27, 1
      %p202 = por %p200, %p201
      %p204 = scmp.ne.s32.totalorder %s187, %s203
      %p205 = scmp.eq.s32.totalorder %s27, 0
      %p206 = por %p204, %p205
      %p207 = scmp.le.s32.totalorder 1, %s21
      %p208 = scmp.lt.s32.totalorder %s21, 3
      %p209 = pnand %p207, %p208
      %p210 = pneg %p209
      // Predicated region
      $region9: #{tpu_custom_call.1} parent=5 // pred_check
        _
      $region10: #{tpu_custom_call.1} parent=5 // pred_check_branch
        %212 = sbr.rel (%p209) target = $region12
      $region11: #{tpu_custom_call.1} parent=5 // pred_region
        %s213 = ssub.s32 %s21, 1
        // Predicated region
        $region13: #{tpu_custom_call.1} parent=11 // pred_check
          %p214 = pneg %p68
        $region14: #{tpu_custom_call.1} parent=11 // pred_check_branch
          %216 = sbr.rel (%p214) target = $region16
        $region15: #{tpu_custom_call.1} parent=11 // pred_region
          %s218 = ssub.s32 1024, 1024
          %219 = vsyncadd [#allocation6], %s218
          %s220 = sshll.u32 [#allocation5], 4
          %s221 = int_to_ptr.vmem [resolvable:$true] %s220
          %226 = dma.hbm_to_vmem [thread:$0]  %s1, 1024, %s221, [#allocation6], 64, 64, 4
        $region16: #{tpu_custom_call.1} parent=11 // pred_fallthru
          _
        // Predicated region
        $region17: #{tpu_custom_call.1} parent=11 // pred_check
          %p227 = pneg %p89
        $region18: #{tpu_custom_call.1} parent=11 // pred_check_branch
          %229 = sbr.rel (%p227) target = $region20
        $region19: #{tpu_custom_call.1} parent=11 // pred_region
          _
        $region20: #{tpu_custom_call.1} parent=11 // pred_fallthru
          _
        // Predicated region
        $region21: #{tpu_custom_call.1} parent=11 // pred_check
          %p230 = pneg %p110
        $region22: #{tpu_custom_call.1} parent=11 // pred_check_branch
          %232 = sbr.rel (%p230) target = $region24
        $region23: #{tpu_custom_call.1} parent=11 // pred_region
          %s234 = ssub.s32 1024, 1024
          %235 = vsyncadd [#allocation6], %s234
          %s236 = sshll.u32 [#allocation7], 4
          %s237 = int_to_ptr.vmem [resolvable:$true] %s236
          %242 = dma.hbm_to_vmem [thread:$0]  %s3, 1024, %s237, [#allocation6], 64, 64, 4
        $region24: #{tpu_custom_call.1} parent=11 // pred_fallthru
          _
        // Predicated region
        $region25: #{tpu_custom_call.1} parent=11 // pred_check
          %p243 = pneg %p131
        $region26: #{tpu_custom_call.1} parent=11 // pred_check_branch
          %245 = sbr.rel (%p243) target = $region28
        $region27: #{tpu_custom_call.1} parent=11 // pred_region
          _
        $region28: #{tpu_custom_call.1} parent=11 // pred_fallthru
          _
        // Predicated region
        $region29: #{tpu_custom_call.1} parent=11 // pred_check
          %p246 = pneg %p152
        $region30: #{tpu_custom_call.1} parent=11 // pred_check_branch
          %248 = sbr.rel (%p246) target = $region32
        $region31: #{tpu_custom_call.1} parent=11 // pred_region
          %s250 = ssub.s32 1024, 1024
          %251 = vsyncadd [#allocation9], %s250
          %s252 = sshll.u32 [#allocation8], 4
          %s253 = int_to_ptr.vmem [resolvable:$true] %s252
          %258 = dma.hbm_to_vmem [thread:$0]  %s5, 1024, %s253, [#allocation9], 64, 64, 4
        $region32: #{tpu_custom_call.1} parent=11 // pred_fallthru
          _
        // Predicated region
        $region33: #{tpu_custom_call.1} parent=11 // pred_check
          %p259 = pneg %p173
        $region34: #{tpu_custom_call.1} parent=11 // pred_check_branch
          %261 = sbr.rel (%p259) target = $region36
        $region35: #{tpu_custom_call.1} parent=11 // pred_region
          _
        $region36: #{tpu_custom_call.1} parent=11 // pred_fallthru
          _
      $region12: #{tpu_custom_call.1} parent=5 // pred_fallthru
        _
      %p262 = scmp.lt.s32.totalorder %s21, 2
      // Predicated region
      $region37: #{tpu_custom_call.1} parent=5 // pred_check
        %p263 = pneg %p262
      $region38: #{tpu_custom_call.1} parent=5 // pred_check_branch
        %265 = sbr.rel (%p263) target = $region40
      $region39: #{tpu_custom_call.1} parent=5 // pred_region
        // Predicated region
        $region41: #{tpu_custom_call.1} parent=39 // pred_check
          %p266 = pneg %p41
        $region42: #{tpu_custom_call.1} parent=39 // pred_check_branch
          %268 = sbr.rel (%p266) target = $region44
        $region43: #{tpu_custom_call.1} parent=39 // pred_region
          %s269 = sand.u32 %s31, 1
          %s270 = scalar_lea.sflag [#allocation3], %s269
          %s271 = sand.u32 %s31, 1
          %s272 = smul.addr %s271, 64
          %s273 = scalar_lea.vmem [#allocation2], %s272
          %s274 = smul.u32 16, %s21
          %s276 = ssub.s32 1024, 1024
          %277 = vsyncadd %s270, %s276
          %s278 = smul.addr %s274, 64
          %s279 = scalar_lea.hbm %s0, %s278
          %s280 = sshll.u32 %s273, 4
          %s281 = int_to_ptr.vmem [resolvable:$true] %s280
          %286 = dma.hbm_to_vmem [thread:$0]  %s279, 1024, %s281, %s270, 64, 64, 4
        $region44: #{tpu_custom_call.1} parent=39 // pred_fallthru
          _
      $region40: #{tpu_custom_call.1} parent=5 // pred_fallthru
        _
      %p287 = scmp.le.s32.totalorder 1, %s21
      %p288 = scmp.lt.s32.totalorder %s21, 3
      %p289 = pnand %p287, %p288
      %p290 = pneg %p289
      // Predicated region
      $region45: #{tpu_custom_call.1} parent=5 // pred_check
        _
      $region46: #{tpu_custom_call.1} parent=5 // pred_check_branch
        %292 = sbr.rel (%p289) target = $region48
      $region47: #{tpu_custom_call.1} parent=5 // pred_region
        %s293 = ssub.s32 %s21, 1
        %s294 = sand.u32 %s34, 1
        %s295 = scalar_lea.sflag [#allocation3], %s294
        %s296 = sand.u32 %s34, 1
        %s297 = smul.addr %s296, 64
        %s298 = scalar_lea.vmem [#allocation2], %s297
        // Predicated region
        $region49: #{tpu_custom_call.1} parent=47 // pred_check
          %p299 = pneg %p47
        $region50: #{tpu_custom_call.1} parent=47 // pred_check_branch
          %301 = sbr.rel (%p299) target = $region52
        $region51: #{tpu_custom_call.1} parent=47 // pred_region
          %302 = dma.done %s295, 1024
        $region52: #{tpu_custom_call.1} parent=47 // pred_fallthru
          _
        // Predicated region
        $region53: #{tpu_custom_call.1} parent=47 // pred_check
          %p303 = pneg %p68
        $region54: #{tpu_custom_call.1} parent=47 // pred_check_branch
          %305 = sbr.rel (%p303) target = $region56
        $region55: #{tpu_custom_call.1} parent=47 // pred_region
          %306 = dma.done [#allocation6], 1024
        $region56: #{tpu_custom_call.1} parent=47 // pred_fallthru
          _
        // Predicated region
        $region57: #{tpu_custom_call.1} parent=47 // pred_check
          %p307 = pneg %p110
        $region58: #{tpu_custom_call.1} parent=47 // pred_check_branch
          %309 = sbr.rel (%p307) target = $region60
        $region59: #{tpu_custom_call.1} parent=47 // pred_region
          %310 = dma.done [#allocation6], 1024
        $region60: #{tpu_custom_call.1} parent=47 // pred_fallthru
          _
        // Predicated region
        $region61: #{tpu_custom_call.1} parent=47 // pred_check
          %p311 = pneg %p152
        $region62: #{tpu_custom_call.1} parent=47 // pred_check_branch
          %313 = sbr.rel (%p311) target = $region64
        $region63: #{tpu_custom_call.1} parent=47 // pred_region
          %314 = dma.done [#allocation9], 1024
        $region64: #{tpu_custom_call.1} parent=47 // pred_fallthru
          _
        %s315 = sand.u32 %s34, 1
        %s316 = scalar_lea.sflag [#allocation3], %s315
        %s317 = sand.u32 %s34, 1
        %s318 = smul.addr %s317, 64
        %s319 = scalar_lea.vmem [#allocation2], %s318
        %p320 = pneg %p47
        %p321 = pneg %p44
        %p322 = pneg %p68
        %p323 = pneg %p65
        %p324 = pneg %p89
        %p325 = pneg %p86
        %p326 = pneg %p110
        %p327 = pneg %p107
        %p328 = pneg %p131
        %p329 = pneg %p128
        %p330 = pneg %p152
        %p331 = pneg %p149
        %p332 = pneg %p173
        %p333 = pneg %p170
        %p334 = pneg %p199
        %p335 = pneg %p196
        %s336 = sand.u32 %s186, 1
        %s337 = scalar_lea.sflag [#allocation4], %s336
        %s338 = sand.u32 %s186, 1
        %s339 = smul.addr %s338, 128
        %s340 = scalar_lea.vmem [#allocation10], %s339
        %s341 = smul.u32 16, %s26
        %s342 = smul.u32 16, %s26
        %v344 = vld [vmem:[%s298] sm:$0xf]
        %v345 = vld [vmem:[%s298 + $0x4] sm:$0xf]
        %v346 = vld [vmem:[%s298 + $0x8] sm:$0xf]
        %v347 = vld [vmem:[%s298 + $0xc] sm:$0xf]
        %v348 = vld [vmem:[%s298 + $0x10] sm:$0xf]
        %v349 = vld [vmem:[%s298 + $0x14] sm:$0xf]
        %v350 = vld [vmem:[%s298 + $0x18] sm:$0xf]
        %v351 = vld [vmem:[%s298 + $0x1c] sm:$0xf]
        %v352 = vld [vmem:[%s298 + $0x20] sm:$0xf]
        %v353 = vld [vmem:[%s298 + $0x24] sm:$0xf]
        %v354 = vld [vmem:[%s298 + $0x28] sm:$0xf]
        %v355 = vld [vmem:[%s298 + $0x2c] sm:$0xf]
        %v356 = vld [vmem:[%s298 + $0x30] sm:$0xf]
        %v357 = vld [vmem:[%s298 + $0x34] sm:$0xf]
        %v358 = vld [vmem:[%s298 + $0x38] sm:$0xf]
        %v359 = vld [vmem:[%s298 + $0x3c] sm:$0xf]
        %v360 = vld [vmem:[#allocation5] sm:$0xf]
        %v361 = vld [vmem:[#allocation5 + $0x4] sm:$0xf]
        %v362 = vld [vmem:[#allocation5 + $0x8] sm:$0xf]
        %v363 = vld [vmem:[#allocation5 + $0xc] sm:$0xf]
        %v364 = vld [vmem:[#allocation5 + $0x10] sm:$0xf]
        %v365 = vld [vmem:[#allocation5 + $0x14] sm:$0xf]
        %v366 = vld [vmem:[#allocation5 + $0x18] sm:$0xf]
        %v367 = vld [vmem:[#allocation5 + $0x1c] sm:$0xf]
        %v368 = vld [vmem:[#allocation5 + $0x20] sm:$0xf]
        %v369 = vld [vmem:[#allocation5 + $0x24] sm:$0xf]
        %v370 = vld [vmem:[#allocation5 + $0x28] sm:$0xf]
        %v371 = vld [vmem:[#allocation5 + $0x2c] sm:$0xf]
        %v372 = vld [vmem:[#allocation5 + $0x30] sm:$0xf]
        %v373 = vld [vmem:[#allocation5 + $0x34] sm:$0xf]
        %v374 = vld [vmem:[#allocation5 + $0x38] sm:$0xf]
        %v375 = vld [vmem:[#allocation5 + $0x3c] sm:$0xf]
        %v376 = vld [vmem:[%s2] sm:$0x1]
        %v378 = vlaneseq
        %v379 = vshrl.u32 %v378, 7
        %v380 = vsub.s32 0, %v379
        %v381 = vrot.slane %v376, %v380
        %v399 = vunpack.c.l.b16 %v344
        %v400 = vunpack.c.l.b16 %v345
        %v401 = vunpack.c.l.b16 %v346
        %v402 = vunpack.c.l.b16 %v347
        %v403 = vunpack.c.l.b16 %v348
        %v404 = vunpack.c.l.b16 %v349
        %v405 = vunpack.c.l.b16 %v350
        %v406 = vunpack.c.l.b16 %v351
        %v407 = vunpack.c.l.b16 %v352
        %v408 = vunpack.c.l.b16 %v353
        %v409 = vunpack.c.l.b16 %v354
        %v410 = vunpack.c.l.b16 %v355
        %v411 = vunpack.c.l.b16 %v356
        %v412 = vunpack.c.l.b16 %v357
        %v413 = vunpack.c.l.b16 %v358
        %v414 = vunpack.c.l.b16 %v359
        %v415 = vpack.c.b16 %v400, %v399
        %v416 = vpack.c.b16 %v402, %v401
        %v417 = vpack.c.b16 %v404, %v403
        %v418 = vpack.c.b16 %v406, %v405
        %v419 = vpack.c.b16 %v408, %v407
        %v420 = vpack.c.b16 %v410, %v409
        %v421 = vpack.c.b16 %v412, %v411
        %v422 = vpack.c.b16 %v414, %v413
        %v447 = vunpack.c.l.b16 %v360
        %v448 = vunpack.c.l.b16 %v361
        %v449 = vunpack.c.l.b16 %v362
        %v450 = vunpack.c.l.b16 %v363
        %v451 = vunpack.c.l.b16 %v364
        %v452 = vunpack.c.l.b16 %v365
        %v453 = vunpack.c.l.b16 %v366
        %v454 = vunpack.c.l.b16 %v367
        %v455 = vunpack.c.l.b16 %v368
        %v456 = vunpack.c.l.b16 %v369
        %v457 = vunpack.c.l.b16 %v370
        %v458 = vunpack.c.l.b16 %v371
        %v459 = vunpack.c.l.b16 %v372
        %v460 = vunpack.c.l.b16 %v373
        %v461 = vunpack.c.l.b16 %v374
        %v462 = vunpack.c.l.b16 %v375
        %v463 = vpack.c.b16 %v448, %v447
        %v464 = vpack.c.b16 %v450, %v449
        %v465 = vpack.c.b16 %v452, %v451
        %v466 = vpack.c.b16 %v454, %v453
        %v467 = vpack.c.b16 %v456, %v455
        %v468 = vpack.c.b16 %v458, %v457
        %v469 = vpack.c.b16 %v460, %v459
        %v470 = vpack.c.b16 %v462, %v461
        %479 = vmatprep.subr.bf16.mxu0 0
        %480 = vmatpush1.bf16.msra.mxu0 %v463
        %481 = vmatprep.subr.bf16.mxu0 0
        %482 = vmatpush1.bf16.msra.mxu0 %v464
        %483 = vmatprep.subr.bf16.mxu0 0
        %484 = vmatpush1.bf16.msra.mxu0 %v465
        %485 = vmatprep.subr.bf16.mxu0 0
        %486 = vmatpush1.bf16.msra.mxu0 %v466
        %487 = vmatprep.subr.bf16.mxu0 0
        %488 = vmatpush1.bf16.msra.mxu0 %v467
        %489 = vmatprep.subr.bf16.mxu0 0
        %490 = vmatpush1.bf16.msra.mxu0 %v468
        %491 = vmatprep.subr.bf16.mxu0 0
        %492 = vmatpush1.bf16.msra.mxu0 %v469
        %493 = vmatprep.subr.bf16.mxu0 0
        %494 = vmatpush1.bf16.msra.mxu0 %v470
        %495 = vmatprep.subr.bf16.mxu0 0
        %496 = vmatpush1.bf16.msra.mxu0 0
        %497 = vmatprep.subr.bf16.mxu0 0
        %498 = vmatpush1.bf16.msra.mxu0 0
        %499 = vmatprep.subr.bf16.mxu0 0
        %500 = vmatpush1.bf16.msra.mxu0 0
        %501 = vmatprep.subr.bf16.mxu0 0
        %502 = vmatpush1.bf16.msra.mxu0 0
        %503 = vmatprep.subr.bf16.mxu0 0
        %504 = vmatpush1.bf16.msra.mxu0 0
        %505 = vmatprep.subr.bf16.mxu0 0
        %506 = vmatpush1.bf16.msra.mxu0 0
        %507 = vmatprep.subr.bf16.mxu0 0
        %508 = vmatpush1.bf16.msra.mxu0 0
        %509 = vmatprep.subr.bf16.mxu0 0
        %510 = vmatpush1.bf16.msra.mxu0 0
        %511 = vmatprep.mubr.bf16.mxu0 0
        %512 = vmatmul.mubr.bf16.gmra.mrb[0].mxu0 %v415
        %v513 = vpop.f32.mrb[0].mxu0
        %v514 = vadd.f32 %v381, %v513
        %v515 = vpop.f32.mrb[0].mxu0
        %v516 = vpop.f32.mrb[0].mxu0
        %v517 = vadd.f32 %v381, %v516
        %v518 = vpop.f32.mrb[0].mxu0
        %519 = vmatprep.mubr.bf16.mxu0 0
        %520 = vmatmul.mubr.bf16.gmra.mrb[0].mxu0 %v416
        %v521 = vpop.f32.mrb[0].mxu0
        %v522 = vadd.f32 %v381, %v521
        %v523 = vpop.f32.mrb[0].mxu0
        %v524 = vpop.f32.mrb[0].mxu0
        %v525 = vadd.f32 %v381, %v524
        %v526 = vpop.f32.mrb[0].mxu0
        %527 = vmatprep.mubr.bf16.mxu0 0
        %528 = vmatmul.mubr.bf16.gmra.mrb[0].mxu0 %v417
        %v529 = vpop.f32.mrb[0].mxu0
        %v530 = vadd.f32 %v381, %v529
        %v531 = vpop.f32.mrb[0].mxu0
        %v532 = vpop.f32.mrb[0].mxu0
        %v533 = vadd.f32 %v381, %v532
        %v534 = vpop.f32.mrb[0].mxu0
        %535 = vmatprep.mubr.bf16.mxu0 0
        %536 = vmatmul.mubr.bf16.gmra.mrb[0].mxu0 %v418
        %v537 = vpop.f32.mrb[0].mxu0
        %v538 = vadd.f32 %v381, %v537
        %v539 = vpop.f32.mrb[0].mxu0
        %v540 = vpop.f32.mrb[0].mxu0
        %v541 = vadd.f32 %v381, %v540
        %v542 = vpop.f32.mrb[0].mxu0
        %543 = vmatprep.mubr.bf16.mxu0 0
        %544 = vmatmul.mubr.bf16.gmra.mrb[0].mxu0 %v419
        %v545 = vpop.f32.mrb[0].mxu0
        %v546 = vadd.f32 %v381, %v545
        %v547 = vpop.f32.mrb[0].mxu0
        %v548 = vpop.f32.mrb[0].mxu0
        %v549 = vadd.f32 %v381, %v548
        %v550 = vpop.f32.mrb[0].mxu0
        %551 = vmatprep.mubr.bf16.mxu0 0
        %552 = vmatmul.mubr.bf16.gmra.mrb[0].mxu0 %v420
        %v553 = vpop.f32.mrb[0].mxu0
        %v554 = vadd.f32 %v381, %v553
        %v555 = vpop.f32.mrb[0].mxu0
        %v556 = vpop.f32.mrb[0].mxu0
        %v557 = vadd.f32 %v381, %v556
        %v558 = vpop.f32.mrb[0].mxu0
        %559 = vmatprep.mubr.bf16.mxu0 0
        %560 = vmatmul.mubr.bf16.gmra.mrb[0].mxu0 %v421
        %v561 = vpop.f32.mrb[0].mxu0
        %v562 = vadd.f32 %v381, %v561
        %v563 = vpop.f32.mrb[0].mxu0
        %v564 = vpop.f32.mrb[0].mxu0
        %v565 = vadd.f32 %v381, %v564
        %v566 = vpop.f32.mrb[0].mxu0
        %567 = vmatprep.mubr.bf16.mxu0 0
        %568 = vmatmul.mubr.bf16.gmra.mrb[0].mxu0 %v422
        %v569 = vpop.f32.mrb[0].mxu0
        %v570 = vadd.f32 %v381, %v569
        %v571 = vpop.f32.mrb[0].mxu0
        %v572 = vpop.f32.mrb[0].mxu0
        %v573 = vadd.f32 %v381, %v572
        %v574 = vpop.f32.mrb[0].mxu0
        %575 = vdwg.mxu0
        %vm576 = vcmp.ge.f32.partialorder %v514, 0.0
        %vm577 = vcmp.ge.f32.partialorder %v517, 0.0
        %vm578 = vcmp.ge.f32.partialorder %v522, 0.0
        %vm579 = vcmp.ge.f32.partialorder %v525, 0.0
        %vm580 = vcmp.ge.f32.partialorder %v530, 0.0
        %vm581 = vcmp.ge.f32.partialorder %v533, 0.0
        %vm582 = vcmp.ge.f32.partialorder %v538, 0.0
        %vm583 = vcmp.ge.f32.partialorder %v541, 0.0
        %vm584 = vcmp.ge.f32.partialorder %v546, 0.0
        %vm585 = vcmp.ge.f32.partialorder %v549, 0.0
        %vm586 = vcmp.ge.f32.partialorder %v554, 0.0
        %vm587 = vcmp.ge.f32.partialorder %v557, 0.0
        %vm588 = vcmp.ge.f32.partialorder %v562, 0.0
        %vm589 = vcmp.ge.f32.partialorder %v565, 0.0
        %vm590 = vcmp.ge.f32.partialorder %v570, 0.0
        %vm591 = vcmp.ge.f32.partialorder %v573, 0.0
        %v592 = vmul.f32 %v514, 0.2
        %v593 = vmul.f32 %v517, 0.2
        %v594 = vmul.f32 %v522, 0.2
        %v595 = vmul.f32 %v525, 0.2
        %v596 = vmul.f32 %v530, 0.2
        %v597 = vmul.f32 %v533, 0.2
        %v598 = vmul.f32 %v538, 0.2
        %v599 = vmul.f32 %v541, 0.2
        %v600 = vmul.f32 %v546, 0.2
        %v601 = vmul.f32 %v549, 0.2
        %v602 = vmul.f32 %v554, 0.2
        %v603 = vmul.f32 %v557, 0.2
        %v604 = vmul.f32 %v562, 0.2
        %v605 = vmul.f32 %v565, 0.2
        %v606 = vmul.f32 %v570, 0.2
        %v607 = vmul.f32 %v573, 0.2
        %v608 = vsel %vm576, %v514, %v592
        %v609 = vsel %vm577, %v517, %v593
        %v610 = vsel %vm578, %v522, %v594
        %v611 = vsel %vm579, %v525, %v595
        %v612 = vsel %vm580, %v530, %v596
        %v613 = vsel %vm581, %v533, %v597
        %v614 = vsel %vm582, %v538, %v598
        %v615 = vsel %vm583, %v541, %v599
        %v616 = vsel %vm584, %v546, %v600
        %v617 = vsel %vm585, %v549, %v601
        %v618 = vsel %vm586, %v554, %v602
        %v619 = vsel %vm587, %v557, %v603
        %v620 = vsel %vm588, %v562, %v604
        %v621 = vsel %vm589, %v565, %v605
        %v622 = vsel %vm590, %v570, %v606
        %v623 = vsel %vm591, %v573, %v607
        %v624 = vld [vmem:[#allocation7] sm:$0xf]
        %v625 = vld [vmem:[#allocation7 + $0x4] sm:$0xf]
        %v626 = vld [vmem:[#allocation7 + $0x8] sm:$0xf]
        %v627 = vld [vmem:[#allocation7 + $0xc] sm:$0xf]
        %v628 = vld [vmem:[#allocation7 + $0x10] sm:$0xf]
        %v629 = vld [vmem:[#allocation7 + $0x14] sm:$0xf]
        %v630 = vld [vmem:[#allocation7 + $0x18] sm:$0xf]
        %v631 = vld [vmem:[#allocation7 + $0x1c] sm:$0xf]
        %v632 = vld [vmem:[#allocation7 + $0x20] sm:$0xf]
        %v633 = vld [vmem:[#allocation7 + $0x24] sm:$0xf]
        %v634 = vld [vmem:[#allocation7 + $0x28] sm:$0xf]
        %v635 = vld [vmem:[#allocation7 + $0x2c] sm:$0xf]
        %v636 = vld [vmem:[#allocation7 + $0x30] sm:$0xf]
        %v637 = vld [vmem:[#allocation7 + $0x34] sm:$0xf]
        %v638 = vld [vmem:[#allocation7 + $0x38] sm:$0xf]
        %v639 = vld [vmem:[#allocation7 + $0x3c] sm:$0xf]
        %v640 = vld [vmem:[%s4] sm:$0x1]
        %v641 = vpack.c.bf16 %v609, %v608
        %v642 = vpack.c.bf16 %v611, %v610
        %v643 = vpack.c.bf16 %v613, %v612
        %v644 = vpack.c.bf16 %v615, %v614
        %v645 = vpack.c.bf16 %v617, %v616
        %v646 = vpack.c.bf16 %v619, %v618
        %v647 = vpack.c.bf16 %v621, %v620
        %v648 = vpack.c.bf16 %v623, %v622
        %v650 = vlaneseq
        %v651 = vshrl.u32 %v650, 7
        %v652 = vsub.s32 0, %v651
        %v653 = vrot.slane %v640, %v652
        %v671 = vunpack.c.l.b16 %v624
        %v672 = vunpack.c.l.b16 %v625
        %v673 = vunpack.c.l.b16 %v626
        %v674 = vunpack.c.l.b16 %v627
        %v675 = vunpack.c.l.b16 %v628
        %v676 = vunpack.c.l.b16 %v629
        %v677 = vunpack.c.l.b16 %v630
        %v678 = vunpack.c.l.b16 %v631
        %v679 = vunpack.c.l.b16 %v632
        %v680 = vunpack.c.l.b16 %v633
        %v681 = vunpack.c.l.b16 %v634
        %v682 = vunpack.c.l.b16 %v635
        %v683 = vunpack.c.l.b16 %v636
        %v684 = vunpack.c.l.b16 %v637
        %v685 = vunpack.c.l.b16 %v638
        %v686 = vunpack.c.l.b16 %v639
        %v687 = vpack.c.b16 %v672, %v671
        %v688 = vpack.c.b16 %v674, %v673
        %v689 = vpack.c.b16 %v676, %v675
        %v690 = vpack.c.b16 %v678, %v677
        %v691 = vpack.c.b16 %v680, %v679
        %v692 = vpack.c.b16 %v682, %v681
        %v693 = vpack.c.b16 %v684, %v683
        %v694 = vpack.c.b16 %v686, %v685
        %703 = vmatprep.subr.bf16.mxu0 0
        %704 = vmatpush1.bf16.msra.mxu0 %v687
        %705 = vmatprep.subr.bf16.mxu0 0
        %706 = vmatpush1.bf16.msra.mxu0 %v688
        %707 = vmatprep.subr.bf16.mxu0 0
        %708 = vmatpush1.bf16.msra.mxu0 %v689
        %709 = vmatprep.subr.bf16.mxu0 0
        %710 = vmatpush1.bf16.msra.mxu0 %v690
        %711 = vmatprep.subr.bf16.mxu0 0
        %712 = vmatpush1.bf16.msra.mxu0 %v691
        %713 = vmatprep.subr.bf16.mxu0 0
        %714 = vmatpush1.bf16.msra.mxu0 %v692
        %715 = vmatprep.subr.bf16.mxu0 0
        %716 = vmatpush1.bf16.msra.mxu0 %v693
        %717 = vmatprep.subr.bf16.mxu0 0
        %718 = vmatpush1.bf16.msra.mxu0 %v694
        %719 = vmatprep.subr.bf16.mxu0 0
        %720 = vmatpush1.bf16.msra.mxu0 0
        %721 = vmatprep.subr.bf16.mxu0 0
        %722 = vmatpush1.bf16.msra.mxu0 0
        %723 = vmatprep.subr.bf16.mxu0 0
        %724 = vmatpush1.bf16.msra.mxu0 0
        %725 = vmatprep.subr.bf16.mxu0 0
        %726 = vmatpush1.bf16.msra.mxu0 0
        %727 = vmatprep.subr.bf16.mxu0 0
        %728 = vmatpush1.bf16.msra.mxu0 0
        %729 = vmatprep.subr.bf16.mxu0 0
        %730 = vmatpush1.bf16.msra.mxu0 0
        %731 = vmatprep.subr.bf16.mxu0 0
        %732 = vmatpush1.bf16.msra.mxu0 0
        %733 = vmatprep.subr.bf16.mxu0 0
        %734 = vmatpush1.bf16.msra.mxu0 0
        %735 = vmatprep.mubr.bf16.mxu0 0
        %736 = vmatmul.mubr.bf16.gmra.mrb[0].mxu0 %v641
        %v737 = vpop.f32.mrb[0].mxu0
        %v738 = vadd.f32 %v653, %v737
        %v739 = vpop.f32.mrb[0].mxu0
        %v740 = vpop.f32.mrb[0].mxu0
        %v741 = vadd.f32 %v653, %v740
        %v742 = vpop.f32.mrb[0].mxu0
        %743 = vmatprep.mubr.bf16.mxu0 0
        %744 = vmatmul.mubr.bf16.gmra.mrb[0].mxu0 %v642
        %v745 = vpop.f32.mrb[0].mxu0
        %v746 = vadd.f32 %v653, %v745
        %v747 = vpop.f32.mrb[0].mxu0
        %v748 = vpop.f32.mrb[0].mxu0
        %v749 = vadd.f32 %v653, %v748
        %v750 = vpop.f32.mrb[0].mxu0
        %751 = vmatprep.mubr.bf16.mxu0 0
        %752 = vmatmul.mubr.bf16.gmra.mrb[0].mxu0 %v643
        %v753 = vpop.f32.mrb[0].mxu0
        %v754 = vadd.f32 %v653, %v753
        %v755 = vpop.f32.mrb[0].mxu0
        %v756 = vpop.f32.mrb[0].mxu0
        %v757 = vadd.f32 %v653, %v756
        %v758 = vpop.f32.mrb[0].mxu0
        %759 = vmatprep.mubr.bf16.mxu0 0
        %760 = vmatmul.mubr.bf16.gmra.mrb[0].mxu0 %v644
        %v761 = vpop.f32.mrb[0].mxu0
        %v762 = vadd.f32 %v653, %v761
        %v763 = vpop.f32.mrb[0].mxu0
        %v764 = vpop.f32.mrb[0].mxu0
        %v765 = vadd.f32 %v653, %v764
        %v766 = vpop.f32.mrb[0].mxu0
        %767 = vmatprep.mubr.bf16.mxu0 0
        %768 = vmatmul.mubr.bf16.gmra.mrb[0].mxu0 %v645
        %v769 = vpop.f32.mrb[0].mxu0
        %v770 = vadd.f32 %v653, %v769
        %v771 = vpop.f32.mrb[0].mxu0
        %v772 = vpop.f32.mrb[0].mxu0
        %v773 = vadd.f32 %v653, %v772
        %v774 = vpop.f32.mrb[0].mxu0
        %775 = vmatprep.mubr.bf16.mxu0 0
        %776 = vmatmul.mubr.bf16.gmra.mrb[0].mxu0 %v646
        %v777 = vpop.f32.mrb[0].mxu0
        %v778 = vadd.f32 %v653, %v777
        %v779 = vpop.f32.mrb[0].mxu0
        %v780 = vpop.f32.mrb[0].mxu0
        %v781 = vadd.f32 %v653, %v780
        %v782 = vpop.f32.mrb[0].mxu0
        %783 = vmatprep.mubr.bf16.mxu0 0
        %784 = vmatmul.mubr.bf16.gmra.mrb[0].mxu0 %v647
        %v785 = vpop.f32.mrb[0].mxu0
        %v786 = vadd.f32 %v653, %v785
        %v787 = vpop.f32.mrb[0].mxu0
        %v788 = vpop.f32.mrb[0].mxu0
        %v789 = vadd.f32 %v653, %v788
        %v790 = vpop.f32.mrb[0].mxu0
        %791 = vmatprep.mubr.bf16.mxu0 0
        %792 = vmatmul.mubr.bf16.gmra.mrb[0].mxu0 %v648
        %v793 = vpop.f32.mrb[0].mxu0
        %v794 = vadd.f32 %v653, %v793
        %v795 = vpop.f32.mrb[0].mxu0
        %v796 = vpop.f32.mrb[0].mxu0
        %v797 = vadd.f32 %v653, %v796
        %v798 = vpop.f32.mrb[0].mxu0
        %799 = vdwg.mxu0
        %vm800 = vcmp.ge.f32.partialorder %v738, 0.0
        %vm801 = vcmp.ge.f32.partialorder %v741, 0.0
        %vm802 = vcmp.ge.f32.partialorder %v746, 0.0
        %vm803 = vcmp.ge.f32.partialorder %v749, 0.0
        %vm804 = vcmp.ge.f32.partialorder %v754, 0.0
        %vm805 = vcmp.ge.f32.partialorder %v757, 0.0
        %vm806 = vcmp.ge.f32.partialorder %v762, 0.0
        %vm807 = vcmp.ge.f32.partialorder %v765, 0.0
        %vm808 = vcmp.ge.f32.partialorder %v770, 0.0
        %vm809 = vcmp.ge.f32.partialorder %v773, 0.0
        %vm810 = vcmp.ge.f32.partialorder %v778, 0.0
        %vm811 = vcmp.ge.f32.partialorder %v781, 0.0
        %vm812 = vcmp.ge.f32.partialorder %v786, 0.0
        %vm813 = vcmp.ge.f32.partialorder %v789, 0.0
        %vm814 = vcmp.ge.f32.partialorder %v794, 0.0
        %vm815 = vcmp.ge.f32.partialorder %v797, 0.0
        %v816 = vmul.f32 %v738, 0.2
        %v817 = vmul.f32 %v741, 0.2
        %v818 = vmul.f32 %v746, 0.2
        %v819 = vmul.f32 %v749, 0.2
        %v820 = vmul.f32 %v754, 0.2
        %v821 = vmul.f32 %v757, 0.2
        %v822 = vmul.f32 %v762, 0.2
        %v823 = vmul.f32 %v765, 0.2
        %v824 = vmul.f32 %v770, 0.2
        %v825 = vmul.f32 %v773, 0.2
        %v826 = vmul.f32 %v778, 0.2
        %v827 = vmul.f32 %v781, 0.2
        %v828 = vmul.f32 %v786, 0.2
        %v829 = vmul.f32 %v789, 0.2
        %v830 = vmul.f32 %v794, 0.2
        %v831 = vmul.f32 %v797, 0.2
        %v832 = vsel %vm800, %v738, %v816
        %v833 = vsel %vm801, %v741, %v817
        %v834 = vsel %vm802, %v746, %v818
        %v835 = vsel %vm803, %v749, %v819
        %v836 = vsel %vm804, %v754, %v820
        %v837 = vsel %vm805, %v757, %v821
        %v838 = vsel %vm806, %v762, %v822
        %v839 = vsel %vm807, %v765, %v823
        %v840 = vsel %vm808, %v770, %v824
        %v841 = vsel %vm809, %v773, %v825
        %v842 = vsel %vm810, %v778, %v826
        %v843 = vsel %vm811, %v781, %v827
        %v844 = vsel %vm812, %v786, %v828
        %v845 = vsel %vm813, %v789, %v829
        %v846 = vsel %vm814, %v794, %v830
        %v847 = vsel %vm815, %v797, %v831
        %v848 = vld [vmem:[#allocation8] sm:$0xf]
        %v849 = vld [vmem:[#allocation8 + $0x4] sm:$0xf]
        %v850 = vld [vmem:[#allocation8 + $0x8] sm:$0xf]
        %v851 = vld [vmem:[#allocation8 + $0xc] sm:$0xf]
        %v852 = vld [vmem:[#allocation8 + $0x10] sm:$0xf]
        %v853 = vld [vmem:[#allocation8 + $0x14] sm:$0xf]
        %v854 = vld [vmem:[#allocation8 + $0x18] sm:$0xf]
        %v855 = vld [vmem:[#allocation8 + $0x1c] sm:$0xf]
        %v856 = vld [vmem:[#allocation8 + $0x20] sm:$0xf]
        %v857 = vld [vmem:[#allocation8 + $0x24] sm:$0xf]
        %v858 = vld [vmem:[#allocation8 + $0x28] sm:$0xf]
        %v859 = vld [vmem:[#allocation8 + $0x2c] sm:$0xf]
        %v860 = vld [vmem:[#allocation8 + $0x30] sm:$0xf]
        %v861 = vld [vmem:[#allocation8 + $0x34] sm:$0xf]
        %v862 = vld [vmem:[#allocation8 + $0x38] sm:$0xf]
        %v863 = vld [vmem:[#allocation8 + $0x3c] sm:$0xf]
        %v864 = vld [vmem:[%s6] sm:$0x1]
        %v865 = vpack.c.bf16 %v833, %v832
        %v866 = vpack.c.bf16 %v835, %v834
        %v867 = vpack.c.bf16 %v837, %v836
        %v868 = vpack.c.bf16 %v839, %v838
        %v869 = vpack.c.bf16 %v841, %v840
        %v870 = vpack.c.bf16 %v843, %v842
        %v871 = vpack.c.bf16 %v845, %v844
        %v872 = vpack.c.bf16 %v847, %v846
        %v874 = vlaneseq
        %v875 = vshrl.u32 %v874, 7
        %v876 = vsub.s32 0, %v875
        %v877 = vrot.slane %v864, %v876
        %v895 = vunpack.c.l.b16 %v848
        %v896 = vunpack.c.l.b16 %v849
        %v897 = vunpack.c.l.b16 %v850
        %v898 = vunpack.c.l.b16 %v851
        %v899 = vunpack.c.l.b16 %v852
        %v900 = vunpack.c.l.b16 %v853
        %v901 = vunpack.c.l.b16 %v854
        %v902 = vunpack.c.l.b16 %v855
        %v903 = vunpack.c.l.b16 %v856
        %v904 = vunpack.c.l.b16 %v857
        %v905 = vunpack.c.l.b16 %v858
        %v906 = vunpack.c.l.b16 %v859
        %v907 = vunpack.c.l.b16 %v860
        %v908 = vunpack.c.l.b16 %v861
        %v909 = vunpack.c.l.b16 %v862
        %v910 = vunpack.c.l.b16 %v863
        %v911 = vpack.c.b16 %v896, %v895
        %v912 = vpack.c.b16 %v898, %v897
        %v913 = vpack.c.b16 %v900, %v899
        %v914 = vpack.c.b16 %v902, %v901
        %v915 = vpack.c.b16 %v904, %v903
        %v916 = vpack.c.b16 %v906, %v905
        %v917 = vpack.c.b16 %v908, %v907
        %v918 = vpack.c.b16 %v910, %v909
        %927 = vmatprep.subr.bf16.mxu0 0
        %928 = vmatpush1.bf16.msra.mxu0 %v911
        %929 = vmatprep.subr.bf16.mxu0 0
        %930 = vmatpush1.bf16.msra.mxu0 %v912
        %931 = vmatprep.subr.bf16.mxu0 0
        %932 = vmatpush1.bf16.msra.mxu0 %v913
        %933 = vmatprep.subr.bf16.mxu0 0
        %934 = vmatpush1.bf16.msra.mxu0 %v914
        %935 = vmatprep.subr.bf16.mxu0 0
        %936 = vmatpush1.bf16.msra.mxu0 %v915
        %937 = vmatprep.subr.bf16.mxu0 0
        %938 = vmatpush1.bf16.msra.mxu0 %v916
        %939 = vmatprep.subr.bf16.mxu0 0
        %940 = vmatpush1.bf16.msra.mxu0 %v917
        %941 = vmatprep.subr.bf16.mxu0 0
        %942 = vmatpush1.bf16.msra.mxu0 %v918
        %943 = vmatprep.subr.bf16.mxu0 0
        %944 = vmatpush1.bf16.msra.mxu0 0
        %945 = vmatprep.subr.bf16.mxu0 0
        %946 = vmatpush1.bf16.msra.mxu0 0
        %947 = vmatprep.subr.bf16.mxu0 0
        %948 = vmatpush1.bf16.msra.mxu0 0
        %949 = vmatprep.subr.bf16.mxu0 0
        %950 = vmatpush1.bf16.msra.mxu0 0
        %951 = vmatprep.subr.bf16.mxu0 0
        %952 = vmatpush1.bf16.msra.mxu0 0
        %953 = vmatprep.subr.bf16.mxu0 0
        %954 = vmatpush1.bf16.msra.mxu0 0
        %955 = vmatprep.subr.bf16.mxu0 0
        %956 = vmatpush1.bf16.msra.mxu0 0
        %957 = vmatprep.subr.bf16.mxu0 0
        %958 = vmatpush1.bf16.msra.mxu0 0
        %959 = vmatprep.mubr.bf16.mxu0 0
        %960 = vmatmul.mubr.bf16.gmra.mrb[0].mxu0 %v865
        %v961 = vpop.f32.mrb[0].mxu0
        %v962 = vadd.f32 %v877, %v961
        %v963 = vpop.f32.mrb[0].mxu0
        %v964 = vpop.f32.mrb[0].mxu0
        %v965 = vadd.f32 %v877, %v964
        %v966 = vpop.f32.mrb[0].mxu0
        %967 = vmatprep.mubr.bf16.mxu0 0
        %968 = vmatmul.mubr.bf16.gmra.mrb[0].mxu0 %v866
        %v969 = vpop.f32.mrb[0].mxu0
        %v970 = vadd.f32 %v877, %v969
        %v971 = vpop.f32.mrb[0].mxu0
        %v972 = vpop.f32.mrb[0].mxu0
        %v973 = vadd.f32 %v877, %v972
        %v974 = vpop.f32.mrb[0].mxu0
        %975 = vmatprep.mubr.bf16.mxu0 0
        %976 = vmatmul.mubr.bf16.gmra.mrb[0].mxu0 %v867
        %v977 = vpop.f32.mrb[0].mxu0
        %v978 = vadd.f32 %v877, %v977
        %v979 = vpop.f32.mrb[0].mxu0
        %v980 = vpop.f32.mrb[0].mxu0
        %v981 = vadd.f32 %v877, %v980
        %v982 = vpop.f32.mrb[0].mxu0
        %983 = vmatprep.mubr.bf16.mxu0 0
        %984 = vmatmul.mubr.bf16.gmra.mrb[0].mxu0 %v868
        %v985 = vpop.f32.mrb[0].mxu0
        %v986 = vadd.f32 %v877, %v985
        %v987 = vpop.f32.mrb[0].mxu0
        %v988 = vpop.f32.mrb[0].mxu0
        %v989 = vadd.f32 %v877, %v988
        %v990 = vpop.f32.mrb[0].mxu0
        %991 = vmatprep.mubr.bf16.mxu0 0
        %992 = vmatmul.mubr.bf16.gmra.mrb[0].mxu0 %v869
        %v993 = vpop.f32.mrb[0].mxu0
        %v994 = vadd.f32 %v877, %v993
        %v995 = vpop.f32.mrb[0].mxu0
        %v996 = vpop.f32.mrb[0].mxu0
        %v997 = vadd.f32 %v877, %v996
        %v998 = vpop.f32.mrb[0].mxu0
        %999 = vmatprep.mubr.bf16.mxu0 0
        %1000 = vmatmul.mubr.bf16.gmra.mrb[0].mxu0 %v870
        %v1001 = vpop.f32.mrb[0].mxu0
        %v1002 = vadd.f32 %v877, %v1001
        %v1003 = vpop.f32.mrb[0].mxu0
        %v1004 = vpop.f32.mrb[0].mxu0
        %v1005 = vadd.f32 %v877, %v1004
        %v1006 = vpop.f32.mrb[0].mxu0
        %1007 = vmatprep.mubr.bf16.mxu0 0
        %1008 = vmatmul.mubr.bf16.gmra.mrb[0].mxu0 %v871
        %v1009 = vpop.f32.mrb[0].mxu0
        %v1010 = vadd.f32 %v877, %v1009
        %v1011 = vpop.f32.mrb[0].mxu0
        %v1012 = vpop.f32.mrb[0].mxu0
        %v1013 = vadd.f32 %v877, %v1012
        %v1014 = vpop.f32.mrb[0].mxu0
        %1015 = vmatprep.mubr.bf16.mxu0 0
        %1016 = vmatmul.mubr.bf16.gmra.mrb[0].mxu0 %v872
        %v1017 = vpop.f32.mrb[0].mxu0
        %v1018 = vadd.f32 %v877, %v1017
        %v1019 = vpop.f32.mrb[0].mxu0
        %v1020 = vpop.f32.mrb[0].mxu0
        %v1021 = vadd.f32 %v877, %v1020
        %v1022 = vpop.f32.mrb[0].mxu0
        %1023 = vdwg.mxu0
        %1024 = vst [vmem:[%s340] sm:$0xff] %v962
        %1025 = vst [vmem:[%s340 + $0x8] sm:$0xff] %v965
        %1026 = vst [vmem:[%s340 + $0x10] sm:$0xff] %v970
        %1027 = vst [vmem:[%s340 + $0x18] sm:$0xff] %v973
        %1028 = vst [vmem:[%s340 + $0x20] sm:$0xff] %v978
        %1029 = vst [vmem:[%s340 + $0x28] sm:$0xff] %v981
        %1030 = vst [vmem:[%s340 + $0x30] sm:$0xff] %v986
        %1031 = vst [vmem:[%s340 + $0x38] sm:$0xff] %v989
        %1032 = vst [vmem:[%s340 + $0x40] sm:$0xff] %v994
        %1033 = vst [vmem:[%s340 + $0x48] sm:$0xff] %v997
        %1034 = vst [vmem:[%s340 + $0x50] sm:$0xff] %v1002
        %1035 = vst [vmem:[%s340 + $0x58] sm:$0xff] %v1005
        %1036 = vst [vmem:[%s340 + $0x60] sm:$0xff] %v1010
        %1037 = vst [vmem:[%s340 + $0x68] sm:$0xff] %v1013
        %1038 = vst [vmem:[%s340 + $0x70] sm:$0xff] %v1018
        %1039 = vst [vmem:[%s340 + $0x78] sm:$0xff] %v1021
        %s1040 = sand.u32 %s186, 1
        %s1041 = scalar_lea.sflag [#allocation4], %s1040
        %s1042 = sand.u32 %s186, 1
        %s1043 = smul.addr %s1042, 128
        %s1044 = scalar_lea.vmem [#allocation10], %s1043
        // Predicated region
        $region65: #{tpu_custom_call.1} parent=47 // pred_check
          %p1045 = pneg %p196
        $region66: #{tpu_custom_call.1} parent=47 // pred_check_branch
          %1047 = sbr.rel (%p1045) target = $region68
        $region67: #{tpu_custom_call.1} parent=47 // pred_region
          %s1048 = smul.u32 16, %s26
          %s1050 = ssub.s32 2048, 2048
          %1051 = vsyncadd %s1041, %s1050
          %s1052 = smul.addr %s1048, 128
          %s1053 = scalar_lea.hbm %s7, %s1052
          %s1054 = sshll.u32 %s1044, 4
          %s1055 = int_to_ptr.vmem [resolvable:$true] %s1054
          %1060 = dma.vmem_to_hbm [thread:$0]  %s1055, 2048, %s1053, %s1041, 128, 128, 8
        $region68: #{tpu_custom_call.1} parent=47 // pred_fallthru
          _
      $region48: #{tpu_custom_call.1} parent=5 // pred_fallthru
        _
      %p1061 = scmp.le.s32.totalorder 2, %s21
      // Predicated region
      $region69: #{tpu_custom_call.1} parent=5 // pred_check
        %p1062 = pneg %p1061
      $region70: #{tpu_custom_call.1} parent=5 // pred_check_branch
        %1064 = sbr.rel (%p1062) target = $region72
      $region71: #{tpu_custom_call.1} parent=5 // pred_region
        %s1065 = ssub.s32 %s21, 2
        // Predicated region
        $region73: #{tpu_custom_call.1} parent=71 // pred_check
          %p1066 = pneg %p202
        $region74: #{tpu_custom_call.1} parent=71 // pred_check_branch
          %1068 = sbr.rel (%p1066) target = $region76
        $region75: #{tpu_custom_call.1} parent=71 // pred_region
          %s1069 = sand.u32 %s187, 1
          %s1070 = scalar_lea.sflag [#allocation4], %s1069
          %s1071 = sand.u32 %s187, 1
          %s1072 = smul.addr %s1071, 128
          %s1073 = scalar_lea.vmem [#allocation10], %s1072
          %1074 = dma.done %s1070, 2048
        $region76: #{tpu_custom_call.1} parent=71 // pred_fallthru
          _
      $region72: #{tpu_custom_call.1} parent=5 // pred_fallthru
        _
    $region6: #{tpu_custom_call.1} parent=1 // loop_footer
      %s25 = sadd.s32 1, %s21
    $region7: #{tpu_custom_call.1} parent=1 // loop_footer_branch
      %20 = sbr.rel target = $region3
    $region8: #{tpu_custom_call.1} parent=1 // loop_exit
      _
    %1075 = vsyncpa [#allocation3], 1
    %s1076 = scalar_lea.sflag [#allocation3], 1
    %1077 = vsyncpa %s1076, 1
    %1078 = vsyncpa [#allocation6], 1
    %1079 = vsyncpa [#allocation9], 1
    %1080 = vsyncpa [#allocation4], 1
    %s1081 = scalar_lea.sflag [#allocation4], 1
    %1082 = vsyncpa %s1081, 1

</llo_original>
